<compile_context>
chip_gen: v7x
topology: tpu7x:2x2x1
jax: 0.10.0
libtpu: 0.0.40
codegen_flags: <defaults>
</compile_context>

<pallas_src>
import math
import functools

import jax
import jax.numpy as jnp
from jax.experimental import pallas as pl
from jax.experimental.pallas import tpu as pltpu


# ----------------------------- Pallas kernel --------------------------------

def _encoder_layer_kernel(num_heads, head_dim, compute_dtype, has_bias,
                          approx_recip, *args):
    """One grid step == one encoder layer applied to one batch row.

    Grid = (batch, num_layers); program_id(1) is the layer index.  The running
    activation lives in the resident output block (constant block index over the
    layer axis), so the only per-step HBM traffic is the per-layer weights.
    """
    if has_bias:
        (x_ref, bias_ref, wqkv_ref, bqkv_ref, wo_ref, bo_ref,
         w1_ref, b1_ref, w2_ref, b2_ref,
         g1_ref, be1_ref, g2_ref, be2_ref, out_ref) = args
    else:
        bias_ref = None
        (x_ref, wqkv_ref, bqkv_ref, wo_ref, bo_ref,
         w1_ref, b1_ref, w2_ref, b2_ref,
         g1_ref, be1_ref, g2_ref, be2_ref, out_ref) = args

    layer = pl.program_id(1)

    # Layer 0 of every batch row: seed the resident output block with the input.
    @pl.when(layer == 0)
    def _():
        out_ref[...] = x_ref[...]

    x = out_ref[0]                                   # (S, D) float32, resident
    seq_len, d_model = x.shape
    H, hd = num_heads, head_dim

    # ---- fused, lane-dense QKV projection: one (S, D) @ (D, 3D) matmul --------
    xc = x.astype(compute_dtype)
    qkv = jnp.dot(xc, wqkv_ref[0],
                  preferred_element_type=jnp.float32) + bqkv_ref[0]     # (S, 3D) f32
    # (1/sqrt(hd) already folded into the Q columns/bias host-side.)

    def split_heads(base):                            # static lane slices -> (H, S, hd)
        return jnp.stack(
            [qkv[:, base + h * hd: base + (h + 1) * hd] for h in range(H)],
            axis=0).astype(compute_dtype)

    qh = split_heads(0)
    kh = split_heads(d_model)
    vh = split_heads(2 * d_model)

    # ---- scaled dot-product attention, heads batched in single dot_generals ---
    s = jnp.einsum('hqd,hkd->hqk', qh, kh,
                   preferred_element_type=jnp.float32)                  # (H, S, S)
    if has_bias:
        s = s + bias_ref[...]          # additive user mask (broadcast over heads)
    s = s - jnp.max(s, axis=-1, keepdims=True)
    e = jnp.exp(s)
    denom = jnp.sum(e, axis=-1, keepdims=True)
    if approx_recip:
        p = e * pl.reciprocal(denom, approx=True)     # EUP slot, VPU stays free
    else:
        p = e / denom

    ctx = jnp.einsum('hqk,hkd->hqd', p.astype(compute_dtype), vh,
                     preferred_element_type=jnp.float32)                # (H, S, hd)

    # Head merge: lane concat to (S, D), then ONE full-D output projection.
    # The head reduction happens inside the MXU accumulator; no (H, S, D)
    # intermediate and no VPU leading-axis sum.
    ctx_flat = jnp.concatenate([ctx[h] for h in range(H)], axis=-1)     # (S, D)
    attn = jnp.dot(ctx_flat.astype(compute_dtype), wo_ref[0],
                   preferred_element_type=jnp.float32) + bo_ref[0]      # (S, D)

    def layer_norm(y, gamma, beta):        # float32 math (v5e has no bf16 VPU)
        mu = jnp.mean(y, axis=-1, keepdims=True)
        yc = y - mu
        var = jnp.mean(yc * yc, axis=-1, keepdims=True)
        return yc * jax.lax.rsqrt(var + 1e-5) * gamma + beta

    # residual + norm1 (dropout == identity in eval mode)
    x1 = layer_norm(x + attn, g1_ref[0], be1_ref[0])

    # ---- feed-forward: Linear -> ReLU -> Linear --------------------------------
    h1 = jnp.dot(x1.astype(compute_dtype), w1_ref[0],
                 preferred_element_type=jnp.float32) + b1_ref[0]
    h1 = jnp.maximum(h1, 0.0)
    ff = jnp.dot(h1.astype(compute_dtype), w2_ref[0],
                 preferred_element_type=jnp.float32) + b2_ref[0]

    # residual + norm2
    x2 = layer_norm(x1 + ff, g2_ref[0], be2_ref[0])

    out_ref[0] = x2          # stays resident in VMEM for the next layer step


# --------------------------- wrapper / pallas_call ---------------------------

def encoder_stack_pallas(x, packed, num_heads, attn_bias=None, *,
                         compute_dtype=jnp.bfloat16, approx_recip=True,
                         vmem_limit_bytes=64 * 1024 * 1024):
    """x: (B, S, D) float32; packed: dict of per-layer weight stacks (leading L).

    attn_bias: optional additive (B, S, S) float32 bias (user mask), or None.
    """
    B, S, D = x.shape
    H = num_heads
    assert D % H == 0
    hd = D // H
    L = packed["wqkv"].shape[0]
    has_bias = attn_bias is not None

    def weight_spec(shape):
        zeros = (0,) * (len(shape) - 1)
        # Per-layer index map: double-buffering prefetches layer l+1's weights
        # while layer l computes.
        return pl.BlockSpec((1,) + tuple(shape[1:]),
                            lambda b, l, zeros=zeros: (l,) + zeros)

    in_specs = [pl.BlockSpec((1, S, D), lambda b, l: (b, 0, 0))]      # x (one row)
    inputs = [x.astype(jnp.float32)]
    if has_bias:
        in_specs.append(pl.BlockSpec((1, S, S), lambda b, l: (b, 0, 0)))
        inputs.append(attn_bias.astype(jnp.float32))

    weight_order = ["wqkv", "bqkv", "wo", "bo", "w1", "b1", "w2", "b2",
                    "g1", "be1", "g2", "be2"]
    for name in weight_order:
        in_specs.append(weight_spec(packed[name].shape))
        inputs.append(packed[name])

    kernel = functools.partial(_encoder_layer_kernel, H, hd, compute_dtype,
                               has_bias, approx_recip)

    out = pl.pallas_call(
        kernel,
        out_shape=jax.ShapeDtypeStruct((B, S, D), jnp.float32),
        grid_spec=pltpu.PrefetchScalarGridSpec(
            num_scalar_prefetch=0,
            grid=(B, L),                       # layers innermost, sequential
            in_specs=in_specs,
            out_specs=pl.BlockSpec((1, S, D), lambda b, l: (b, 0, 0)),
        ),
        compiler_params=pltpu.CompilerParams(
            dimension_semantics=("parallel", "arbitrary"),
            vmem_limit_bytes=vmem_limit_bytes),
    )(*inputs)

    return out


# ---------------------- host-side parameter packing --------------------------

def pack_layer_params(layers, num_heads, compute_dtype=jnp.bfloat16):
    """Stack per-layer params with a leading L axis.

    wqkv: (L, D, 3*D)  columns packed as [wq | wk | wv]; the 1/sqrt(head_dim)
          scale is folded into the Q columns (and bq) so the kernel never scales
          the (H, S, S) score tensor.
    Matmul weights are cast to `compute_dtype` (bf16 MXU feed); biases and
    LayerNorm params stay float32.
    """
    D = layers[0]["wq"].shape[0]
    H = num_heads
    hd = D // H
    scale = 1.0 / math.sqrt(hd)

    def per_layer(lp):
        F = lp["w1"].shape[1]
        wqkv = jnp.concatenate([lp["wq"] * scale, lp["wk"], lp["wv"]], axis=1)
        bqkv = jnp.concatenate([lp["bq"] * scale, lp["bk"], lp["bv"]]).reshape(1, 3 * D)
        return dict(
            wqkv=wqkv.astype(compute_dtype),
            bqkv=bqkv.astype(jnp.float32),
            wo=lp["wo"].astype(compute_dtype),
            bo=lp["bo"].reshape(1, D).astype(jnp.float32),
            w1=lp["w1"].astype(compute_dtype),
            b1=lp["b1"].reshape(1, F).astype(jnp.float32),
            w2=lp["w2"].astype(compute_dtype),
            b2=lp["b2"].reshape(1, D).astype(jnp.float32),
            g1=lp["g1"].reshape(1, D).astype(jnp.float32),
            be1=lp["be1"].reshape(1, D).astype(jnp.float32),
            g2=lp["g2"].reshape(1, D).astype(jnp.float32),
            be2=lp["be2"].reshape(1, D).astype(jnp.float32),
        )

    packed = [per_layer(lp) for lp in layers]
    return {k: jnp.stack([p[k] for p in packed], axis=0) for k in packed[0]}


def make_attention_bias(mask, batch, seq):
    """Optional user mask -> additive (B, S, S) bias (0 keep, -1e30 masked).

    mask may be (S, S) or (B, S, S) with 0 == masked (PyTorch masked_fill(mask==0)).
    """
    # TODO(synk): per-head masks ((B, H, S, S)) are not supported by this (B, S, S) bias.
    m = jnp.broadcast_to(jnp.asarray(mask), (batch, seq, seq))
    return jnp.where(m == 0, jnp.float32(-1e30), jnp.float32(0.0))


# ------------------------------ glue (plain JAX) -----------------------------

def make_positional_encoding(max_len, d_model):
    position = jnp.arange(max_len, dtype=jnp.float32)[:, None]
    div_term = jnp.exp(jnp.arange(0, d_model, 2, dtype=jnp.float32)
                       * (-math.log(10000.0) / d_model))
    pe = jnp.zeros((max_len, d_model), dtype=jnp.float32)
    pe = pe.at[:, 0::2].set(jnp.sin(position * div_term))
    pe = pe.at[:, 1::2].set(jnp.cos(position * div_term))
    return pe[None]                                   # (1, max_len, d_model)


def init_params(key, vocab_size, d_model, num_layers, ff_hidden_dim):
    params = {}
    key, sub = jax.random.split(key)
    params["embedding"] = 0.05 * jax.random.normal(
        sub, (vocab_size, d_model), dtype=jnp.float32)
    layers = []
    for _ in range(num_layers):
        lp = {}
        for name, shape in [("wq", (d_model, d_model)), ("wk", (d_model, d_model)),
                            ("wv", (d_model, d_model)), ("wo", (d_model, d_model)),
                            ("w1", (d_model, ff_hidden_dim)),
                            ("w2", (ff_hidden_dim, d_model))]:
            key, sub = jax.random.split(key)
            lp[name] = 0.05 * jax.random.normal(sub, shape, dtype=jnp.float32)
        lp["bq"] = jnp.zeros((d_model,), jnp.float32)
        lp["bk"] = jnp.zeros((d_model,), jnp.float32)
        lp["bv"] = jnp.zeros((d_model,), jnp.float32)
        lp["bo"] = jnp.zeros((d_model,), jnp.float32)
        lp["b1"] = jnp.zeros((ff_hidden_dim,), jnp.float32)
        lp["b2"] = jnp.zeros((d_model,), jnp.float32)
        lp["g1"] = jnp.ones((d_model,), jnp.float32)
        lp["be1"] = jnp.zeros((d_model,), jnp.float32)
        lp["g2"] = jnp.ones((d_model,), jnp.float32)
        lp["be2"] = jnp.zeros((d_model,), jnp.float32)
        layers.append(lp)
    params["layers"] = layers
    return params


def encoder_forward(params, src, pe, num_heads, mask=None, *,
                    compute_dtype=jnp.bfloat16, approx_recip=True):
    """src: (B, S) int32 token ids -> (B, S, D) float32."""
    B, S = src.shape
    x = params["embedding"][src]                      # embedding lookup (plain-JAX gather)
    x = x + pe[:, :S]                                 # positional encoding (no sqrt(d) scale,
                                                      # matching the PyTorch reference)
    # dropout: eval-mode identity
    packed = pack_layer_params(params["layers"], num_heads, compute_dtype)
    attn_bias = None if mask is None else make_attention_bias(mask, B, S)
    return encoder_stack_pallas(x, packed, num_heads, attn_bias,
                                compute_dtype=compute_dtype,
                                approx_recip=approx_recip)


# ------------------------- pure-JAX reference (f32) ---------------------------

def _reference_forward(params, src, pe, num_heads, mask=None):
    x = params["embedding"][src] + pe[:, : src.shape[1]]
    B, S, D = x.shape
    H = num_heads
    hd = D // H

    def ln(y, g, b):
        mu = y.mean(-1, keepdims=True)
        var = ((y - mu) ** 2).mean(-1, keepdims=True)
        return (y - mu) / jnp.sqrt(var + 1e-5) * g + b

    for lp in params["layers"]:
        q = x @ lp["wq"] + lp["bq"]
        k = x @ lp["wk"] + lp["bk"]
        v = x @ lp["wv"] + lp["bv"]
        split = lambda t: t.reshape(B, S, H, hd).transpose(0, 2, 1, 3)
        qh, kh, vh = split(q), split(k), split(v)
        s = jnp.einsum('bhqd,bhkd->bhqk', qh, kh) / math.sqrt(hd)
        if mask is not None:
            s = jnp.where(jnp.asarray(mask) == 0, -jnp.inf, s)
        a = jax.nn.softmax(s, axis=-1)
        o = jnp.einsum('bhqk,bhkd->bhqd', a, vh).transpose(0, 2, 1, 3).reshape(B, S, D)
        attn = o @ lp["wo"] + lp["bo"]
        x = ln(x + attn, lp["g1"], lp["be1"])
        ffo = jnp.maximum(x @ lp["w1"] + lp["b1"], 0.0) @ lp["w2"] + lp["b2"]
        x = ln(x + ffo, lp["g2"], lp["be2"])
    return x


# ---------------------------------- main -------------------------------------

if __name__ == "__main__":
    vocab_size = 50
    d_model = 32
    num_layers = 2
    num_heads = 4
    ff_hidden_dim = 64
    max_len = 64
    batch, seq = 2, 8

    key = jax.random.PRNGKey(0)
    key, pkey, skey = jax.random.split(key, 3)

    params = init_params(pkey, vocab_size, d_model, num_layers, ff_hidden_dim)
    pe = make_positional_encoding(max_len, d_model)
    src = jax.random.randint(skey, (batch, seq), 0, vocab_size, dtype=jnp.int32)

    fwd = jax.jit(functools.partial(encoder_forward, num_heads=num_heads))
    out = fwd(params, src, pe)
    jax.block_until_ready(out)
    assert out.shape == (batch, seq, d_model)

    # Sanity check vs. a pure-JAX f32 reference (loose tol: bf16 MXU operands).
    ref = _reference_forward(params, src, pe, num_heads)
    assert jnp.allclose(out, ref, atol=1e-1, rtol=1e-1), \
        float(jnp.max(jnp.abs(out - ref)))

    print("KERNEL_OK")
</pallas_src>

<mosaic_0001>
module attributes {stable_mosaic.version = 11 : i64} {
  func.func @_encoder_layer_kernel(%arg0: i32, %arg1: i32, %arg2: memref<1x8x32xf32, #tpu.memory_space<vmem>>, %arg3: memref<1x32x96xbf16, #tpu.memory_space<vmem>>, %arg4: memref<1x1x96xf32, #tpu.memory_space<vmem>>, %arg5: memref<1x32x32xbf16, #tpu.memory_space<vmem>>, %arg6: memref<1x1x32xf32, #tpu.memory_space<vmem>>, %arg7: memref<1x32x64xbf16, #tpu.memory_space<vmem>>, %arg8: memref<1x1x64xf32, #tpu.memory_space<vmem>>, %arg9: memref<1x64x32xbf16, #tpu.memory_space<vmem>>, %arg10: memref<1x1x32xf32, #tpu.memory_space<vmem>>, %arg11: memref<1x1x32xf32, #tpu.memory_space<vmem>>, %arg12: memref<1x1x32xf32, #tpu.memory_space<vmem>>, %arg13: memref<1x1x32xf32, #tpu.memory_space<vmem>>, %arg14: memref<1x1x32xf32, #tpu.memory_space<vmem>>, %arg15: memref<1x8x32xf32, #tpu.memory_space<vmem>>) attributes {dimension_semantics = [#tpu.dimension_semantics<parallel>, #tpu.dimension_semantics<arbitrary>], iteration_bounds = array<i64: 2, 2>, scalar_prefetch = 0 : i64, scratch_operands = 0 : i64, tpu.core_type = #tpu.core_type<tc>, window_params = [{transform_indices = @transform_0, window_bounds = array<i64: 1, 8, 32>}, {transform_indices = @transform_1, window_bounds = array<i64: 1, 32, 96>}, {transform_indices = @transform_2, window_bounds = array<i64: 1, 1, 96>}, {transform_indices = @transform_3, window_bounds = array<i64: 1, 32, 32>}, {transform_indices = @transform_4, window_bounds = array<i64: 1, 1, 32>}, {transform_indices = @transform_5, window_bounds = array<i64: 1, 32, 64>}, {transform_indices = @transform_6, window_bounds = array<i64: 1, 1, 64>}, {transform_indices = @transform_7, window_bounds = array<i64: 1, 64, 32>}, {transform_indices = @transform_8, window_bounds = array<i64: 1, 1, 32>}, {transform_indices = @transform_9, window_bounds = array<i64: 1, 1, 32>}, {transform_indices = @transform_10, window_bounds = array<i64: 1, 1, 32>}, {transform_indices = @transform_11, window_bounds = array<i64: 1, 1, 32>}, {transform_indices = @transform_12, window_bounds = array<i64: 1, 1, 32>}, {transform_indices = @transform_13, window_bounds = array<i64: 1, 8, 32>}]} {
    %c0_i32 = arith.constant 0 : i32
    %0 = arith.cmpi eq, %arg1, %c0_i32 : i32
    %1 = arith.extui %0 : i1 to i32
    %c0_i32_0 = arith.constant 0 : i32
    %2 = arith.cmpi ne, %1, %c0_i32_0 : i32
    scf.if %2 {
      %c0_60 = arith.constant 0 : index
      %c0_61 = arith.constant 0 : index
      %c0_62 = arith.constant 0 : index
      %144 = vector.load %arg2[%c0_60, %c0_61, %c0_62] : memref<1x8x32xf32, #tpu.memory_space<vmem>>, vector<1x8x32xf32>
      %c0_63 = arith.constant 0 : index
      %c0_64 = arith.constant 0 : index
      %c0_65 = arith.constant 0 : index
      %145 = vector.load %arg15[%c0_63, %c0_64, %c0_65] : memref<1x8x32xf32, #tpu.memory_space<vmem>>, vector<1x8x32xf32>
      tpu.vector_store %arg15[%c0_63, %c0_64, %c0_65], %144 {strides = array<i32>} : memref<1x8x32xf32, #tpu.memory_space<vmem>>, vector<1x8x32xf32>,
    } else {
    }
    %c0 = arith.constant 0 : index
    %c0_1 = arith.constant 0 : index
    %c0_2 = arith.constant 0 : index
    %3 = vector.load %arg15[%c0, %c0_1, %c0_2] : memref<1x8x32xf32, #tpu.memory_space<vmem>>, vector<1x8x32xf32>
    %4 = vector.shape_cast %3 : vector<1x8x32xf32> to vector<8x32xf32>
    %5 = arith.truncf %4 : vector<8x32xf32> to vector<8x32xbf16>
    %c0_3 = arith.constant 0 : index
    %c0_4 = arith.constant 0 : index
    %c0_5 = arith.constant 0 : index
    %6 = vector.load %arg3[%c0_3, %c0_4, %c0_5] : memref<1x32x96xbf16, #tpu.memory_space<vmem>>, vector<1x32x96xbf16>
    %7 = vector.shape_cast %6 : vector<1x32x96xbf16> to vector<32x96xbf16>
    %cst = arith.constant dense<0.000000e+00> : vector<8x96xf32>
    %8 = tpu.matmul %5, %7, %cst {dimension_numbers = #tpu.dot_dimension_numbers<[1], [0], [0], [1], [0, 0, 1, 1], [], []>} : vector<8x32xbf16>, vector<32x96xbf16>, vector<8x96xf32> -> vector<8x96xf32>
    %c0_6 = arith.constant 0 : index
    %c0_7 = arith.constant 0 : index
    %c0_8 = arith.constant 0 : index
    %9 = vector.load %arg4[%c0_6, %c0_7, %c0_8] : memref<1x1x96xf32, #tpu.memory_space<vmem>>, vector<1x1x96xf32>
    %10 = vector.shape_cast %9 : vector<1x1x96xf32> to vector<1x96xf32>
    %11 = vector.broadcast %10 : vector<1x96xf32> to vector<8x96xf32>
    %12 = arith.addf %8, %11 : vector<8x96xf32>
    %13 = vector.extract_strided_slice %12 {offsets = [0, 0], sizes = [8, 8], strides = [1, 1]} : vector<8x96xf32> to vector<8x8xf32>
    %14 = vector.extract_strided_slice %12 {offsets = [0, 8], sizes = [8, 8], strides = [1, 1]} : vector<8x96xf32> to vector<8x8xf32>
    %15 = vector.extract_strided_slice %12 {offsets = [0, 16], sizes = [8, 8], strides = [1, 1]} : vector<8x96xf32> to vector<8x8xf32>
    %16 = vector.extract_strided_slice %12 {offsets = [0, 24], sizes = [8, 8], strides = [1, 1]} : vector<8x96xf32> to vector<8x8xf32>
    %17 = vector.shape_cast %13 : vector<8x8xf32> to vector<1x8x8xf32>
    %18 = vector.shape_cast %14 : vector<8x8xf32> to vector<1x8x8xf32>
    %19 = vector.shape_cast %15 : vector<8x8xf32> to vector<1x8x8xf32>
    %20 = vector.shape_cast %16 : vector<8x8xf32> to vector<1x8x8xf32>
    %21 = tpu.concatenate %17, %18, %19, %20 in 0 : vector<1x8x8xf32>, vector<1x8x8xf32>, vector<1x8x8xf32>, vector<1x8x8xf32> -> vector<4x8x8xf32>
    %22 = arith.truncf %21 : vector<4x8x8xf32> to vector<4x8x8xbf16>
    %23 = vector.extract_strided_slice %12 {offsets = [0, 32], sizes = [8, 8], strides = [1, 1]} : vector<8x96xf32> to vector<8x8xf32>
    %24 = vector.extract_strided_slice %12 {offsets = [0, 40], sizes = [8, 8], strides = [1, 1]} : vector<8x96xf32> to vector<8x8xf32>
    %25 = vector.extract_strided_slice %12 {offsets = [0, 48], sizes = [8, 8], strides = [1, 1]} : vector<8x96xf32> to vector<8x8xf32>
    %26 = vector.extract_strided_slice %12 {offsets = [0, 56], sizes = [8, 8], strides = [1, 1]} : vector<8x96xf32> to vector<8x8xf32>
    %27 = vector.shape_cast %23 : vector<8x8xf32> to vector<1x8x8xf32>
    %28 = vector.shape_cast %24 : vector<8x8xf32> to vector<1x8x8xf32>
    %29 = vector.shape_cast %25 : vector<8x8xf32> to vector<1x8x8xf32>
    %30 = vector.shape_cast %26 : vector<8x8xf32> to vector<1x8x8xf32>
    %31 = tpu.concatenate %27, %28, %29, %30 in 0 : vector<1x8x8xf32>, vector<1x8x8xf32>, vector<1x8x8xf32>, vector<1x8x8xf32> -> vector<4x8x8xf32>
    %32 = arith.truncf %31 : vector<4x8x8xf32> to vector<4x8x8xbf16>
    %33 = vector.extract_strided_slice %12 {offsets = [0, 64], sizes = [8, 8], strides = [1, 1]} : vector<8x96xf32> to vector<8x8xf32>
    %34 = vector.extract_strided_slice %12 {offsets = [0, 72], sizes = [8, 8], strides = [1, 1]} : vector<8x96xf32> to vector<8x8xf32>
    %35 = vector.extract_strided_slice %12 {offsets = [0, 80], sizes = [8, 8], strides = [1, 1]} : vector<8x96xf32> to vector<8x8xf32>
    %36 = vector.extract_strided_slice %12 {offsets = [0, 88], sizes = [8, 8], strides = [1, 1]} : vector<8x96xf32> to vector<8x8xf32>
    %37 = vector.shape_cast %33 : vector<8x8xf32> to vector<1x8x8xf32>
    %38 = vector.shape_cast %34 : vector<8x8xf32> to vector<1x8x8xf32>
    %39 = vector.shape_cast %35 : vector<8x8xf32> to vector<1x8x8xf32>
    %40 = vector.shape_cast %36 : vector<8x8xf32> to vector<1x8x8xf32>
    %41 = tpu.concatenate %37, %38, %39, %40 in 0 : vector<1x8x8xf32>, vector<1x8x8xf32>, vector<1x8x8xf32>, vector<1x8x8xf32> -> vector<4x8x8xf32>
    %42 = arith.truncf %41 : vector<4x8x8xf32> to vector<4x8x8xbf16>
    "tpu.trace_start"() <{level = 10 : i32, message = "hqd,hkd->hqk"}> : () -> ()
    %cst_9 = arith.constant dense<0.000000e+00> : vector<4x8x8xf32>
    %43 = tpu.matmul %22, %32, %cst_9 {dimension_numbers = #tpu.dot_dimension_numbers<[2], [2], [1], [1], [0, 0, 0, 1, 1, 1], [0], [0]>} : vector<4x8x8xbf16>, vector<4x8x8xbf16>, vector<4x8x8xf32> -> vector<4x8x8xf32>
    "tpu.trace_stop"() : () -> ()
    %cst_10 = arith.constant dense<0xFF800000> : vector<4x8xf32>
    %44 = vector.multi_reduction <maximumf>, %43, %cst_10 [2] : vector<4x8x8xf32> to vector<4x8xf32>
    %45 = vector.shape_cast %44 : vector<4x8xf32> to vector<4x8x1xf32>
    %46 = vector.broadcast %45 : vector<4x8x1xf32> to vector<4x8x8xf32>
    %47 = arith.subf %43, %46 : vector<4x8x8xf32>
    %48 = math.exp %47 : vector<4x8x8xf32>
    %cst_11 = arith.constant dense<0.000000e+00> : vector<4x8xf32>
    %49 = vector.multi_reduction <add>, %48, %cst_11 [2] : vector<4x8x8xf32> to vector<4x8xf32>
    %50 = vector.shape_cast %49 : vector<4x8xf32> to vector<4x8x1xf32>
    %51 = tpu.reciprocal %50 {approx = true} : vector<4x8x1xf32> -> vector<4x8x1xf32>
    %52 = vector.broadcast %51 : vector<4x8x1xf32> to vector<4x8x8xf32>
    %53 = arith.mulf %48, %52 : vector<4x8x8xf32>
    %54 = arith.truncf %53 : vector<4x8x8xf32> to vector<4x8x8xbf16>
    "tpu.trace_start"() <{level = 10 : i32, message = "hqk,hkd->hqd"}> : () -> ()
    %cst_12 = arith.constant dense<0.000000e+00> : vector<4x8x8xf32>
    %55 = tpu.matmul %54, %42, %cst_12 {dimension_numbers = #tpu.dot_dimension_numbers<[2], [1], [1], [2], [0, 0, 0, 1, 1, 2], [0], [0]>} : vector<4x8x8xbf16>, vector<4x8x8xbf16>, vector<4x8x8xf32> -> vector<4x8x8xf32>
    "tpu.trace_stop"() : () -> ()
    %56 = vector.extract_strided_slice %55 {offsets = [0, 0, 0], sizes = [1, 8, 8], strides = [1, 1, 1]} : vector<4x8x8xf32> to vector<1x8x8xf32>
    %57 = vector.shape_cast %56 : vector<1x8x8xf32> to vector<8x8xf32>
    %58 = vector.extract_strided_slice %55 {offsets = [1, 0, 0], sizes = [1, 8, 8], strides = [1, 1, 1]} : vector<4x8x8xf32> to vector<1x8x8xf32>
    %59 = vector.shape_cast %58 : vector<1x8x8xf32> to vector<8x8xf32>
    %60 = vector.extract_strided_slice %55 {offsets = [2, 0, 0], sizes = [1, 8, 8], strides = [1, 1, 1]} : vector<4x8x8xf32> to vector<1x8x8xf32>
    %61 = vector.shape_cast %60 : vector<1x8x8xf32> to vector<8x8xf32>
    %62 = vector.extract_strided_slice %55 {offsets = [3, 0, 0], sizes = [1, 8, 8], strides = [1, 1, 1]} : vector<4x8x8xf32> to vector<1x8x8xf32>
    %63 = vector.shape_cast %62 : vector<1x8x8xf32> to vector<8x8xf32>
    %64 = tpu.concatenate %57, %59, %61, %63 in 1 : vector<8x8xf32>, vector<8x8xf32>, vector<8x8xf32>, vector<8x8xf32> -> vector<8x32xf32>
    %65 = arith.truncf %64 : vector<8x32xf32> to vector<8x32xbf16>
    %c0_13 = arith.constant 0 : index
    %c0_14 = arith.constant 0 : index
    %c0_15 = arith.constant 0 : index
    %66 = vector.load %arg5[%c0_13, %c0_14, %c0_15] : memref<1x32x32xbf16, #tpu.memory_space<vmem>>, vector<1x32x32xbf16>
    %67 = vector.shape_cast %66 : vector<1x32x32xbf16> to vector<32x32xbf16>
    %cst_16 = arith.constant dense<0.000000e+00> : vector<8x32xf32>
    %68 = tpu.matmul %65, %67, %cst_16 {dimension_numbers = #tpu.dot_dimension_numbers<[1], [0], [0], [1], [0, 0, 1, 1], [], []>} : vector<8x32xbf16>, vector<32x32xbf16>, vector<8x32xf32> -> vector<8x32xf32>
    %c0_17 = arith.constant 0 : index
    %c0_18 = arith.constant 0 : index
    %c0_19 = arith.constant 0 : index
    %69 = vector.load %arg6[%c0_17, %c0_18, %c0_19] : memref<1x1x32xf32, #tpu.memory_space<vmem>>, vector<1x1x32xf32>
    %70 = vector.shape_cast %69 : vector<1x1x32xf32> to vector<1x32xf32>
    %71 = vector.broadcast %70 : vector<1x32xf32> to vector<8x32xf32>
    %72 = arith.addf %68, %71 : vector<8x32xf32>
    %73 = arith.addf %4, %72 : vector<8x32xf32>
    %c0_20 = arith.constant 0 : index
    %c0_21 = arith.constant 0 : index
    %c0_22 = arith.constant 0 : index
    %74 = vector.load %arg11[%c0_20, %c0_21, %c0_22] : memref<1x1x32xf32, #tpu.memory_space<vmem>>, vector<1x1x32xf32>
    %75 = vector.shape_cast %74 : vector<1x1x32xf32> to vector<1x32xf32>
    %c0_23 = arith.constant 0 : index
    %c0_24 = arith.constant 0 : index
    %c0_25 = arith.constant 0 : index
    %76 = vector.load %arg12[%c0_23, %c0_24, %c0_25] : memref<1x1x32xf32, #tpu.memory_space<vmem>>, vector<1x1x32xf32>
    %77 = vector.shape_cast %76 : vector<1x1x32xf32> to vector<1x32xf32>
    %cst_26 = arith.constant dense<0.000000e+00> : vector<8xf32>
    %78 = vector.multi_reduction <add>, %73, %cst_26 [1] : vector<8x32xf32> to vector<8xf32>
    %79 = vector.shape_cast %78 : vector<8xf32> to vector<8x1xf32>
    %cst_27 = arith.constant 3.200000e+01 : f32
    %80 = vector.broadcast %cst_27 : f32 to vector<8x1xf32>
    %81 = arith.divf %79, %80 : vector<8x1xf32>
    %82 = vector.broadcast %81 : vector<8x1xf32> to vector<8x32xf32>
    %83 = arith.subf %73, %82 : vector<8x32xf32>
    %84 = arith.mulf %83, %83 : vector<8x32xf32>
    %cst_28 = arith.constant dense<0.000000e+00> : vector<8xf32>
    %85 = vector.multi_reduction <add>, %84, %cst_28 [1] : vector<8x32xf32> to vector<8xf32>
    %86 = vector.shape_cast %85 : vector<8xf32> to vector<8x1xf32>
    %cst_29 = arith.constant 3.200000e+01 : f32
    %87 = vector.broadcast %cst_29 : f32 to vector<8x1xf32>
    %88 = arith.divf %86, %87 : vector<8x1xf32>
    %cst_30 = arith.constant 9.99999974E-6 : f32
    %89 = vector.broadcast %cst_30 : f32 to vector<8x1xf32>
    %90 = arith.addf %88, %89 : vector<8x1xf32>
    %91 = math.rsqrt %90 : vector<8x1xf32>
    %92 = vector.broadcast %91 : vector<8x1xf32> to vector<8x32xf32>
    %93 = arith.mulf %83, %92 : vector<8x32xf32>
    %94 = vector.broadcast %75 : vector<1x32xf32> to vector<8x32xf32>
    %95 = arith.mulf %93, %94 : vector<8x32xf32>
    %96 = vector.broadcast %77 : vector<1x32xf32> to vector<8x32xf32>
    %97 = arith.addf %95, %96 : vector<8x32xf32>
    %98 = arith.truncf %97 : vector<8x32xf32> to vector<8x32xbf16>
    %c0_31 = arith.constant 0 : index
    %c0_32 = arith.constant 0 : index
    %c0_33 = arith.constant 0 : index
    %99 = vector.load %arg7[%c0_31, %c0_32, %c0_33] : memref<1x32x64xbf16, #tpu.memory_space<vmem>>, vector<1x32x64xbf16>
    %100 = vector.shape_cast %99 : vector<1x32x64xbf16> to vector<32x64xbf16>
    %cst_34 = arith.constant dense<0.000000e+00> : vector<8x64xf32>
    %101 = tpu.matmul %98, %100, %cst_34 {dimension_numbers = #tpu.dot_dimension_numbers<[1], [0], [0], [1], [0, 0, 1, 1], [], []>} : vector<8x32xbf16>, vector<32x64xbf16>, vector<8x64xf32> -> vector<8x64xf32>
    %c0_35 = arith.constant 0 : index
    %c0_36 = arith.constant 0 : index
    %c0_37 = arith.constant 0 : index
    %102 = vector.load %arg8[%c0_35, %c0_36, %c0_37] : memref<1x1x64xf32, #tpu.memory_space<vmem>>, vector<1x1x64xf32>
    %103 = vector.shape_cast %102 : vector<1x1x64xf32> to vector<1x64xf32>
    %104 = vector.broadcast %103 : vector<1x64xf32> to vector<8x64xf32>
    %105 = arith.addf %101, %104 : vector<8x64xf32>
    %cst_38 = arith.constant 0.000000e+00 : f32
    %106 = vector.broadcast %cst_38 : f32 to vector<8x64xf32>
    %107 = arith.maximumf %105, %106 : vector<8x64xf32>
    %108 = arith.truncf %107 : vector<8x64xf32> to vector<8x64xbf16>
    %c0_39 = arith.constant 0 : index
    %c0_40 = arith.constant 0 : index
    %c0_41 = arith.constant 0 : index
    %109 = vector.load %arg9[%c0_39, %c0_40, %c0_41] : memref<1x64x32xbf16, #tpu.memory_space<vmem>>, vector<1x64x32xbf16>
    %110 = vector.shape_cast %109 : vector<1x64x32xbf16> to vector<64x32xbf16>
    %cst_42 = arith.constant dense<0.000000e+00> : vector<8x32xf32>
    %111 = tpu.matmul %108, %110, %cst_42 {dimension_numbers = #tpu.dot_dimension_numbers<[1], [0], [0], [1], [0, 0, 1, 1], [], []>} : vector<8x64xbf16>, vector<64x32xbf16>, vector<8x32xf32> -> vector<8x32xf32>
    %c0_43 = arith.constant 0 : index
    %c0_44 = arith.constant 0 : index
    %c0_45 = arith.constant 0 : index
    %112 = vector.load %arg10[%c0_43, %c0_44, %c0_45] : memref<1x1x32xf32, #tpu.memory_space<vmem>>, vector<1x1x32xf32>
    %113 = vector.shape_cast %112 : vector<1x1x32xf32> to vector<1x32xf32>
    %114 = vector.broadcast %113 : vector<1x32xf32> to vector<8x32xf32>
    %115 = arith.addf %111, %114 : vector<8x32xf32>
    %116 = arith.addf %97, %115 : vector<8x32xf32>
    %c0_46 = arith.constant 0 : index
    %c0_47 = arith.constant 0 : index
    %c0_48 = arith.constant 0 : index
    %117 = vector.load %arg13[%c0_46, %c0_47, %c0_48] : memref<1x1x32xf32, #tpu.memory_space<vmem>>, vector<1x1x32xf32>
    %118 = vector.shape_cast %117 : vector<1x1x32xf32> to vector<1x32xf32>
    %c0_49 = arith.constant 0 : index
    %c0_50 = arith.constant 0 : index
    %c0_51 = arith.constant 0 : index
    %119 = vector.load %arg14[%c0_49, %c0_50, %c0_51] : memref<1x1x32xf32, #tpu.memory_space<vmem>>, vector<1x1x32xf32>
    %120 = vector.shape_cast %119 : vector<1x1x32xf32> to vector<1x32xf32>
    %cst_52 = arith.constant dense<0.000000e+00> : vector<8xf32>
    %121 = vector.multi_reduction <add>, %116, %cst_52 [1] : vector<8x32xf32> to vector<8xf32>
    %122 = vector.shape_cast %121 : vector<8xf32> to vector<8x1xf32>
    %cst_53 = arith.constant 3.200000e+01 : f32
    %123 = vector.broadcast %cst_53 : f32 to vector<8x1xf32>
    %124 = arith.divf %122, %123 : vector<8x1xf32>
    %125 = vector.broadcast %124 : vector<8x1xf32> to vector<8x32xf32>
    %126 = arith.subf %116, %125 : vector<8x32xf32>
    %127 = arith.mulf %126, %126 : vector<8x32xf32>
    %cst_54 = arith.constant dense<0.000000e+00> : vector<8xf32>
    %128 = vector.multi_reduction <add>, %127, %cst_54 [1] : vector<8x32xf32> to vector<8xf32>
    %129 = vector.shape_cast %128 : vector<8xf32> to vector<8x1xf32>
    %cst_55 = arith.constant 3.200000e+01 : f32
    %130 = vector.broadcast %cst_55 : f32 to vector<8x1xf32>
    %131 = arith.divf %129, %130 : vector<8x1xf32>
    %cst_56 = arith.constant 9.99999974E-6 : f32
    %132 = vector.broadcast %cst_56 : f32 to vector<8x1xf32>
    %133 = arith.addf %131, %132 : vector<8x1xf32>
    %134 = math.rsqrt %133 : vector<8x1xf32>
    %135 = vector.broadcast %134 : vector<8x1xf32> to vector<8x32xf32>
    %136 = arith.mulf %126, %135 : vector<8x32xf32>
    %137 = vector.broadcast %118 : vector<1x32xf32> to vector<8x32xf32>
    %138 = arith.mulf %136, %137 : vector<8x32xf32>
    %139 = vector.broadcast %120 : vector<1x32xf32> to vector<8x32xf32>
    %140 = arith.addf %138, %139 : vector<8x32xf32>
    %c0_57 = arith.constant 0 : index
    %c0_58 = arith.constant 0 : index
    %c0_59 = arith.constant 0 : index
    %141 = vector.load %arg15[%c0_57, %c0_58, %c0_59] : memref<1x8x32xf32, #tpu.memory_space<vmem>>, vector<1x8x32xf32>
    %142 = vector.shape_cast %141 : vector<1x8x32xf32> to vector<8x32xf32>
    %143 = vector.shape_cast %140 : vector<8x32xf32> to vector<1x8x32xf32>
    tpu.vector_store %arg15[%c0_57, %c0_58, %c0_59], %143 {strides = array<i32>} : memref<1x8x32xf32, #tpu.memory_space<vmem>>, vector<1x8x32xf32>,
    return
  }
  func.func @transform_0(%arg0: i32, %arg1: i32) -> (i32, i32, i32) {
    %c0_i32 = arith.constant 0 : i32
    %c0_i32_0 = arith.constant 0 : i32
    %c0_i32_1 = arith.constant 0 : i32
    return %arg0, %c0_i32, %c0_i32_0 : i32, i32, i32
  }
  func.func @transform_1(%arg0: i32, %arg1: i32) -> (i32, i32, i32) {
    %c0_i32 = arith.constant 0 : i32
    %c0_i32_0 = arith.constant 0 : i32
    %c0_i32_1 = arith.constant 0 : i32
    return %arg1, %c0_i32, %c0_i32_0 : i32, i32, i32
  }
  func.func @transform_2(%arg0: i32, %arg1: i32) -> (i32, i32, i32) {
    %c0_i32 = arith.constant 0 : i32
    %c0_i32_0 = arith.constant 0 : i32
    %c0_i32_1 = arith.constant 0 : i32
    return %arg1, %c0_i32, %c0_i32_0 : i32, i32, i32
  }
  func.func @transform_3(%arg0: i32, %arg1: i32) -> (i32, i32, i32) {
    %c0_i32 = arith.constant 0 : i32
    %c0_i32_0 = arith.constant 0 : i32
    %c0_i32_1 = arith.constant 0 : i32
    return %arg1, %c0_i32, %c0_i32_0 : i32, i32, i32
  }
  func.func @transform_4(%arg0: i32, %arg1: i32) -> (i32, i32, i32) {
    %c0_i32 = arith.constant 0 : i32
    %c0_i32_0 = arith.constant 0 : i32
    %c0_i32_1 = arith.constant 0 : i32
    return %arg1, %c0_i32, %c0_i32_0 : i32, i32, i32
  }
  func.func @transform_5(%arg0: i32, %arg1: i32) -> (i32, i32, i32) {
    %c0_i32 = arith.constant 0 : i32
    %c0_i32_0 = arith.constant 0 : i32
    %c0_i32_1 = arith.constant 0 : i32
    return %arg1, %c0_i32, %c0_i32_0 : i32, i32, i32
  }
  func.func @transform_6(%arg0: i32, %arg1: i32) -> (i32, i32, i32) {
    %c0_i32 = arith.constant 0 : i32
    %c0_i32_0 = arith.constant 0 : i32
    %c0_i32_1 = arith.constant 0 : i32
    return %arg1, %c0_i32, %c0_i32_0 : i32, i32, i32
  }
  func.func @transform_7(%arg0: i32, %arg1: i32) -> (i32, i32, i32) {
    %c0_i32 = arith.constant 0 : i32
    %c0_i32_0 = arith.constant 0 : i32
    %c0_i32_1 = arith.constant 0 : i32
    return %arg1, %c0_i32, %c0_i32_0 : i32, i32, i32
  }
  func.func @transform_8(%arg0: i32, %arg1: i32) -> (i32, i32, i32) {
    %c0_i32 = arith.constant 0 : i32
    %c0_i32_0 = arith.constant 0 : i32
    %c0_i32_1 = arith.constant 0 : i32
    return %arg1, %c0_i32, %c0_i32_0 : i32, i32, i32
  }
  func.func @transform_9(%arg0: i32, %arg1: i32) -> (i32, i32, i32) {
    %c0_i32 = arith.constant 0 : i32
    %c0_i32_0 = arith.constant 0 : i32
    %c0_i32_1 = arith.constant 0 : i32
    return %arg1, %c0_i32, %c0_i32_0 : i32, i32, i32
  }
  func.func @transform_10(%arg0: i32, %arg1: i32) -> (i32, i32, i32) {
    %c0_i32 = arith.constant 0 : i32
    %c0_i32_0 = arith.constant 0 : i32
    %c0_i32_1 = arith.constant 0 : i32
    return %arg1, %c0_i32, %c0_i32_0 : i32, i32, i32
  }
  func.func @transform_11(%arg0: i32, %arg1: i32) -> (i32, i32, i32) {
    %c0_i32 = arith.constant 0 : i32
    %c0_i32_0 = arith.constant 0 : i32
    %c0_i32_1 = arith.constant 0 : i32
    return %arg1, %c0_i32, %c0_i32_0 : i32, i32, i32
  }
  func.func @transform_12(%arg0: i32, %arg1: i32) -> (i32, i32, i32) {
    %c0_i32 = arith.constant 0 : i32
    %c0_i32_0 = arith.constant 0 : i32
    %c0_i32_1 = arith.constant 0 : i32
    return %arg1, %c0_i32, %c0_i32_0 : i32, i32, i32
  }
  func.func @transform_13(%arg0: i32, %arg1: i32) -> (i32, i32, i32) {
    %c0_i32 = arith.constant 0 : i32
    %c0_i32_0 = arith.constant 0 : i32
    %c0_i32_1 = arith.constant 0 : i32
    return %arg0, %c0_i32, %c0_i32_0 : i32, i32, i32
  }
}

</mosaic_0001>

<llo_original>
// kernel: encoder_forward.1
$region0: #{encoder_forward.1}
  #allocation0 [shape = 'u32[]', space=smem, size = 0x4, offset = 0x4, fixed_abs, tag = 'smem constant byte address 0x4 - core index']
  #allocation1 [shape = 'u32[144,128]{1,0:T(1,128)}', space=vmem, size = 0x12000, scoped, tag = 'internal scratch']
  %s0 = inlined_call_operand.hbm [shape: f32[2,8,32], index: 0, kind: input, shape index: {}]
  %s1 = inlined_call_operand.hbm [shape: bf16[2,32,96], index: 1, kind: input, shape index: {}]
  %s2 = inlined_call_operand.hbm [shape: f32[2,1,96], index: 2, kind: input, shape index: {}]
  %s3 = inlined_call_operand.hbm [shape: bf16[2,32,32], index: 3, kind: input, shape index: {}]
  %s4 = inlined_call_operand.hbm [shape: f32[2,1,32], index: 4, kind: input, shape index: {}]
  %s5 = inlined_call_operand.hbm [shape: bf16[2,32,64], index: 5, kind: input, shape index: {}]
  %s6 = inlined_call_operand.hbm [shape: f32[2,1,64], index: 6, kind: input, shape index: {}]
  %s7 = inlined_call_operand.hbm [shape: bf16[2,64,32], index: 7, kind: input, shape index: {}]
  %s8 = inlined_call_operand.hbm [shape: f32[2,1,32], index: 8, kind: input, shape index: {}]
  %s9 = inlined_call_operand.hbm [shape: f32[2,1,32], index: 9, kind: input, shape index: {}]
  %s10 = inlined_call_operand.hbm [shape: f32[2,1,32], index: 10, kind: input, shape index: {}]
  %s11 = inlined_call_operand.hbm [shape: f32[2,1,32], index: 11, kind: input, shape index: {}]
  %s12 = inlined_call_operand.hbm [shape: f32[2,1,32], index: 12, kind: input, shape index: {}]
  %s13 = inlined_call_operand.hbm [shape: f32[2,8,32], index: 13, kind: output, shape index: {}]
  %s14 = sld [smem:[#allocation0]]
  $region141: #{encoder_forward.1} parent=0
    _
  %s16 = ssub.s32 1, %s14
  %s17 = scalar_select 0, %s16, %s14
  $region1: #{encoder_forward.1} parent=0
    #allocation2 [shape = 'u8[8192]{0}', space=vmem, size = 0x2000, scoped, tag = 'input window, operand 0']
    #allocation3 [shape = 's32[2]{0}', space=sflag, size = 0x8, scoped, tag = 'scoped memory for encoder_forward.1']
    #allocation4 [shape = 's32[2]{0}', space=sflag, size = 0x8, scoped, tag = 'scoped memory for encoder_forward.1']
    #allocation5 [shape = 'u8[16384]{0}', space=vmem, size = 0x4000, scoped, tag = 'input window, operand 1']
    #allocation6 [shape = 's32[2]{0}', space=sflag, size = 0x8, scoped, tag = 'scoped memory for encoder_forward.1']
    #allocation7 [shape = 'u8[1024]{0}', space=vmem, size = 0x400, scoped, tag = 'input window, operand 2']
    #allocation8 [shape = 'u8[16384]{0}', space=vmem, size = 0x4000, scoped, tag = 'input window, operand 3']
    #allocation9 [shape = 's32[2]{0}', space=sflag, size = 0x8, scoped, tag = 'scoped memory for encoder_forward.1']
    #allocation10 [shape = 'u8[1024]{0}', space=vmem, size = 0x400, scoped, tag = 'input window, operand 4']
    #allocation11 [shape = 'u8[16384]{0}', space=vmem, size = 0x4000, scoped, tag = 'input window, operand 5']
    #allocation12 [shape = 's32[2]{0}', space=sflag, size = 0x8, scoped, tag = 'scoped memory for encoder_forward.1']
    #allocation13 [shape = 'u8[1024]{0}', space=vmem, size = 0x400, scoped, tag = 'input window, operand 6']
    #allocation14 [shape = 'u8[32768]{0}', space=vmem, size = 0x8000, scoped, tag = 'input window, operand 7']
    #allocation15 [shape = 's32[2]{0}', space=sflag, size = 0x8, scoped, tag = 'scoped memory for encoder_forward.1']
    #allocation16 [shape = 'u8[1024]{0}', space=vmem, size = 0x400, scoped, tag = 'input window, operand 8']
    #allocation17 [shape = 'u8[1024]{0}', space=vmem, size = 0x400, scoped, tag = 'input window, operand 9']
    #allocation18 [shape = 's32[2]{0}', space=sflag, size = 0x8, scoped, tag = 'scoped memory for encoder_forward.1']
    #allocation19 [shape = 'u8[1024]{0}', space=vmem, size = 0x400, scoped, tag = 'input window, operand 10']
    #allocation20 [shape = 'u8[1024]{0}', space=vmem, size = 0x400, scoped, tag = 'input window, operand 11']
    #allocation21 [shape = 's32[2]{0}', space=sflag, size = 0x8, scoped, tag = 'scoped memory for encoder_forward.1']
    #allocation22 [shape = 'u8[1024]{0}', space=vmem, size = 0x400, scoped, tag = 'input window, operand 12']
    #allocation23 [shape = 'u8[8192]{0}', space=vmem, size = 0x2000, scoped, tag = 'output window, operand 0']
    %18 = vsyncpa [#allocation3], 0
    %s19 = scalar_lea.sflag [#allocation3], 1
    %20 = vsyncpa %s19, 0
    %21 = vsyncpa [#allocation6], 0
    %s22 = scalar_lea.sflag [#allocation6], 1
    %23 = vsyncpa %s22, 0
    %24 = vsyncpa [#allocation9], 0
    %s25 = scalar_lea.sflag [#allocation9], 1
    %26 = vsyncpa %s25, 0
    %27 = vsyncpa [#allocation12], 0
    %s28 = scalar_lea.sflag [#allocation12], 1
    %29 = vsyncpa %s28, 0
    %30 = vsyncpa [#allocation15], 0
    %s31 = scalar_lea.sflag [#allocation15], 1
    %32 = vsyncpa %s31, 0
    %33 = vsyncpa [#allocation18], 0
    %s34 = scalar_lea.sflag [#allocation18], 1
    %35 = vsyncpa %s34, 0
    %36 = vsyncpa [#allocation21], 0
    %s37 = scalar_lea.sflag [#allocation21], 1
    %38 = vsyncpa %s37, 0
    %39 = vsyncpa [#allocation4], 0
    %s40 = scalar_lea.sflag [#allocation4], 1
    %41 = vsyncpa %s40, 0
    loop: start=0, step=1, limit=6
    $region2: #{encoder_forward.1} parent=1 // loop_pre_header
      _
    $region3: #{encoder_forward.1} parent=1 // loop_header
      %s43 = sphi 0, %s47
      %p44 = scmp.ge.s32.totalorder %s43, 6
      %s50 = sphi 0, %s62
      %s51 = sphi 0, %s58
      %s52 = sphi 0, %s50
      %s53 = sphi 0, %s51
      %s54 = sphi 0, %s52
      %s55 = sphi 0, %s53
      %s65 = sphi 0, %s67
      %s68 = sphi 0, %s65
      %s69 = sphi 0, %s68
      %s85 = sphi 0, %s69
      %s91 = sphi 0, %s93
      %s94 = sphi 0, %s91
      %s95 = sphi 0, %s94
      %s111 = sphi 0, %s95
      %s117 = sphi 0, %s119
      %s120 = sphi 0, %s117
      %s121 = sphi 0, %s120
      %s137 = sphi 0, %s121
      %s143 = sphi 0, %s145
      %s146 = sphi 0, %s143
      %s147 = sphi 0, %s146
      %s163 = sphi 0, %s147
      %s169 = sphi 0, %s171
      %s172 = sphi 0, %s169
      %s173 = sphi 0, %s172
      %s189 = sphi 0, %s173
      %s195 = sphi 0, %s197
      %s198 = sphi 0, %s195
      %s199 = sphi 0, %s198
      %s215 = sphi 0, %s199
      %s221 = sphi 0, %s223
      %s224 = sphi 0, %s221
      %s225 = sphi 0, %s224
      %s241 = sphi 0, %s225
      %s247 = sphi 0, %s249
      %s250 = sphi 0, %s247
      %s251 = sphi 0, %s250
      %s267 = sphi 0, %s251
      %s273 = sphi 0, %s275
      %s276 = sphi 0, %s273
      %s277 = sphi 0, %s276
      %s293 = sphi 0, %s277
      %s299 = sphi 0, %s301
      %s302 = sphi 0, %s299
      %s303 = sphi 0, %s302
      %s319 = sphi 0, %s303
      %s325 = sphi 0, %s327
      %s328 = sphi 0, %s325
      %s329 = sphi 0, %s328
      %s345 = sphi 0, %s329
      %s351 = sphi 0, %s353
      %s354 = sphi 0, %s351
      %s355 = sphi 0, %s354
      %s371 = sphi 0, %s355
      %s377 = sphi 0, %s379
      %s380 = sphi 0, %s377
      %s381 = sphi 0, %s380
      %s397 = sphi 0, %s381
      %s403 = sphi 0, %s405
      %s406 = sphi 0, %s403
      %s407 = sphi 0, %s406
      %s423 = sphi 0, %s407
    $region4: #{encoder_forward.1} parent=1 // loop_header_branch
      %46 = sbr.rel (%p44) target = $region8
    $region5: #{encoder_forward.1} parent=1 // loop_body
      %s48 = ssub.s32 %s43, 1
      %s49 = ssub.s32 %s43, 2
      %s56 = sadd.s32 1, %s51
      %p57 = scmp.ge.s32.totalorder %s56, 2
      %s58 = scalar_select %p57, 0, %s56
      %s59 = sadd.s32 1, %s50
      %s60 = scalar_select %p57, %s59, %s50
      %p61 = scmp.ge.s32.totalorder %s60, 2
      %s62 = scalar_select %p61, 0, %s60
      %s63 = ssub.s32 %s50, %s62
      %p64 = scmp.eq.s32.totalorder %s63, 0
      %s66 = sadd.s32 %s65, 1
      %s67 = scalar_select %p64, %s65, %s66
      %p70 = pneg %p64
      %p71 = scmp.eq.s32.totalorder %s43, 3
      %p72 = por %p70, %p71
      %p73 = scmp.ne.s32.totalorder %s65, %s68
      %p74 = scmp.eq.s32.totalorder %s43, 0
      %p75 = por %p73, %p74
      %p76 = scmp.ne.s32.totalorder %s65, %s68
      %p77 = scmp.eq.s32.totalorder %s48, 3
      %p78 = por %p76, %p77
      %p79 = scmp.ne.s32.totalorder %s68, %s69
      %p80 = scmp.eq.s32.totalorder %s48, 0
      %p81 = por %p79, %p80
      %p82 = scmp.ne.s32.totalorder %s68, %s69
      %p83 = scmp.eq.s32.totalorder %s49, 3
      %p84 = por %p82, %p83
      %p86 = scmp.ne.s32.totalorder %s69, %s85
      %p87 = scmp.eq.s32.totalorder %s49, 0
      %p88 = por %p86, %p87
      %s89 = ssub.s32 %s51, %s58
      %p90 = scmp.eq.s32.totalorder %s89, 0
      %s92 = sadd.s32 %s91, 1
      %s93 = scalar_select %p90, %s91, %s92
      %p96 = pneg %p90
      %p97 = scmp.eq.s32.totalorder %s43, 3
      %p98 = por %p96, %p97
      %p99 = scmp.ne.s32.totalorder %s91, %s94
      %p100 = scmp.eq.s32.totalorder %s43, 0
      %p101 = por %p99, %p100
      %p102 = scmp.ne.s32.totalorder %s91, %s94
      %p103 = scmp.eq.s32.totalorder %s48, 3
      %p104 = por %p102, %p103
      %p105 = scmp.ne.s32.totalorder %s94, %s95
      %p106 = scmp.eq.s32.totalorder %s48, 0
      %p107 = por %p105, %p106
      %p108 = scmp.ne.s32.totalorder %s94, %s95
      %p109 = scmp.eq.s32.totalorder %s49, 3
      %p110 = por %p108, %p109
      %p112 = scmp.ne.s32.totalorder %s95, %s111
      %p113 = scmp.eq.s32.totalorder %s49, 0
      %p114 = por %p112, %p113
      %s115 = ssub.s32 %s51, %s58
      %p116 = scmp.eq.s32.totalorder %s115, 0
      %s118 = sadd.s32 %s117, 1
      %s119 = scalar_select %p116, %s117, %s118
      %p122 = pneg %p116
      %p123 = scmp.eq.s32.totalorder %s43, 3
      %p124 = por %p122, %p123
      %p125 = scmp.ne.s32.totalorder %s117, %s120
      %p126 = scmp.eq.s32.totalorder %s43, 0
      %p127 = por %p125, %p126
      %p128 = scmp.ne.s32.totalorder %s117, %s120
      %p129 = scmp.eq.s32.totalorder %s48, 3
      %p130 = por %p128, %p129
      %p131 = scmp.ne.s32.totalorder %s120, %s121
      %p132 = scmp.eq.s32.totalorder %s48, 0
      %p133 = por %p131, %p132
      %p134 = scmp.ne.s32.totalorder %s120, %s121
      %p135 = scmp.eq.s32.totalorder %s49, 3
      %p136 = por %p134, %p135
      %p138 = scmp.ne.s32.totalorder %s121, %s137
      %p139 = scmp.eq.s32.totalorder %s49, 0
      %p140 = por %p138, %p139
      %s141 = ssub.s32 %s51, %s58
      %p142 = scmp.eq.s32.totalorder %s141, 0
      %s144 = sadd.s32 %s143, 1
      %s145 = scalar_select %p142, %s143, %s144
      %p148 = pneg %p142
      %p149 = scmp.eq.s32.totalorder %s43, 3
      %p150 = por %p148, %p149
      %p151 = scmp.ne.s32.totalorder %s143, %s146
      %p152 = scmp.eq.s32.totalorder %s43, 0
      %p153 = por %p151, %p152
      %p154 = scmp.ne.s32.totalorder %s143, %s146
      %p155 = scmp.eq.s32.totalorder %s48, 3
      %p156 = por %p154, %p155
      %p157 = scmp.ne.s32.totalorder %s146, %s147
      %p158 = scmp.eq.s32.totalorder %s48, 0
      %p159 = por %p157, %p158
      %p160 = scmp.ne.s32.totalorder %s146, %s147
      %p161 = scmp.eq.s32.totalorder %s49, 3
      %p162 = por %p160, %p161
      %p164 = scmp.ne.s32.totalorder %s147, %s163
      %p165 = scmp.eq.s32.totalorder %s49, 0
      %p166 = por %p164, %p165
      %s167 = ssub.s32 %s51, %s58
      %p168 = scmp.eq.s32.totalorder %s167, 0
      %s170 = sadd.s32 %s169, 1
      %s171 = scalar_select %p168, %s169, %s170
      %p174 = pneg %p168
      %p175 = scmp.eq.s32.totalorder %s43, 3
      %p176 = por %p174, %p175
      %p177 = scmp.ne.s32.totalorder %s169, %s172
      %p178 = scmp.eq.s32.totalorder %s43, 0
      %p179 = por %p177, %p178
      %p180 = scmp.ne.s32.totalorder %s169, %s172
      %p181 = scmp.eq.s32.totalorder %s48, 3
      %p182 = por %p180, %p181
      %p183 = scmp.ne.s32.totalorder %s172, %s173
      %p184 = scmp.eq.s32.totalorder %s48, 0
      %p185 = por %p183, %p184
      %p186 = scmp.ne.s32.totalorder %s172, %s173
      %p187 = scmp.eq.s32.totalorder %s49, 3
      %p188 = por %p186, %p187
      %p190 = scmp.ne.s32.totalorder %s173, %s189
      %p191 = scmp.eq.s32.totalorder %s49, 0
      %p192 = por %p190, %p191
      %s193 = ssub.s32 %s51, %s58
      %p194 = scmp.eq.s32.totalorder %s193, 0
      %s196 = sadd.s32 %s195, 1
      %s197 = scalar_select %p194, %s195, %s196
      %p200 = pneg %p194
      %p201 = scmp.eq.s32.totalorder %s43, 3
      %p202 = por %p200, %p201
      %p203 = scmp.ne.s32.totalorder %s195, %s198
      %p204 = scmp.eq.s32.totalorder %s43, 0
      %p205 = por %p203, %p204
      %p206 = scmp.ne.s32.totalorder %s195, %s198
      %p207 = scmp.eq.s32.totalorder %s48, 3
      %p208 = por %p206, %p207
      %p209 = scmp.ne.s32.totalorder %s198, %s199
      %p210 = scmp.eq.s32.totalorder %s48, 0
      %p211 = por %p209, %p210
      %p212 = scmp.ne.s32.totalorder %s198, %s199
      %p213 = scmp.eq.s32.totalorder %s49, 3
      %p214 = por %p212, %p213
      %p216 = scmp.ne.s32.totalorder %s199, %s215
      %p217 = scmp.eq.s32.totalorder %s49, 0
      %p218 = por %p216, %p217
      %s219 = ssub.s32 %s51, %s58
      %p220 = scmp.eq.s32.totalorder %s219, 0
      %s222 = sadd.s32 %s221, 1
      %s223 = scalar_select %p220, %s221, %s222
      %p226 = pneg %p220
      %p227 = scmp.eq.s32.totalorder %s43, 3
      %p228 = por %p226, %p227
      %p229 = scmp.ne.s32.totalorder %s221, %s224
      %p230 = scmp.eq.s32.totalorder %s43, 0
      %p231 = por %p229, %p230
      %p232 = scmp.ne.s32.totalorder %s221, %s224
      %p233 = scmp.eq.s32.totalorder %s48, 3
      %p234 = por %p232, %p233
      %p235 = scmp.ne.s32.totalorder %s224, %s225
      %p236 = scmp.eq.s32.totalorder %s48, 0
      %p237 = por %p235, %p236
      %p238 = scmp.ne.s32.totalorder %s224, %s225
      %p239 = scmp.eq.s32.totalorder %s49, 3
      %p240 = por %p238, %p239
      %p242 = scmp.ne.s32.totalorder %s225, %s241
      %p243 = scmp.eq.s32.totalorder %s49, 0
      %p244 = por %p242, %p243
      %s245 = ssub.s32 %s51, %s58
      %p246 = scmp.eq.s32.totalorder %s245, 0
      %s248 = sadd.s32 %s247, 1
      %s249 = scalar_select %p246, %s247, %s248
      %p252 = pneg %p246
      %p253 = scmp.eq.s32.totalorder %s43, 3
      %p254 = por %p252, %p253
      %p255 = scmp.ne.s32.totalorder %s247, %s250
      %p256 = scmp.eq.s32.totalorder %s43, 0
      %p257 = por %p255, %p256
      %p258 = scmp.ne.s32.totalorder %s247, %s250
      %p259 = scmp.eq.s32.totalorder %s48, 3
      %p260 = por %p258, %p259
      %p261 = scmp.ne.s32.totalorder %s250, %s251
      %p262 = scmp.eq.s32.totalorder %s48, 0
      %p263 = por %p261, %p262
      %p264 = scmp.ne.s32.totalorder %s250, %s251
      %p265 = scmp.eq.s32.totalorder %s49, 3
      %p266 = por %p264, %p265
      %p268 = scmp.ne.s32.totalorder %s251, %s267
      %p269 = scmp.eq.s32.totalorder %s49, 0
      %p270 = por %p268, %p269
      %s271 = ssub.s32 %s51, %s58
      %p272 = scmp.eq.s32.totalorder %s271, 0
      %s274 = sadd.s32 %s273, 1
      %s275 = scalar_select %p272, %s273, %s274
      %p278 = pneg %p272
      %p279 = scmp.eq.s32.totalorder %s43, 3
      %p280 = por %p278, %p279
      %p281 = scmp.ne.s32.totalorder %s273, %s276
      %p282 = scmp.eq.s32.totalorder %s43, 0
      %p283 = por %p281, %p282
      %p284 = scmp.ne.s32.totalorder %s273, %s276
      %p285 = scmp.eq.s32.totalorder %s48, 3
      %p286 = por %p284, %p285
      %p287 = scmp.ne.s32.totalorder %s276, %s277
      %p288 = scmp.eq.s32.totalorder %s48, 0
      %p289 = por %p287, %p288
      %p290 = scmp.ne.s32.totalorder %s276, %s277
      %p291 = scmp.eq.s32.totalorder %s49, 3
      %p292 = por %p290, %p291
      %p294 = scmp.ne.s32.totalorder %s277, %s293
      %p295 = scmp.eq.s32.totalorder %s49, 0
      %p296 = por %p294, %p295
      %s297 = ssub.s32 %s51, %s58
      %p298 = scmp.eq.s32.totalorder %s297, 0
      %s300 = sadd.s32 %s299, 1
      %s301 = scalar_select %p298, %s299, %s300
      %p304 = pneg %p298
      %p305 = scmp.eq.s32.totalorder %s43, 3
      %p306 = por %p304, %p305
      %p307 = scmp.ne.s32.totalorder %s299, %s302
      %p308 = scmp.eq.s32.totalorder %s43, 0
      %p309 = por %p307, %p308
      %p310 = scmp.ne.s32.totalorder %s299, %s302
      %p311 = scmp.eq.s32.totalorder %s48, 3
      %p312 = por %p310, %p311
      %p313 = scmp.ne.s32.totalorder %s302, %s303
      %p314 = scmp.eq.s32.totalorder %s48, 0
      %p315 = por %p313, %p314
      %p316 = scmp.ne.s32.totalorder %s302, %s303
      %p317 = scmp.eq.s32.totalorder %s49, 3
      %p318 = por %p316, %p317
      %p320 = scmp.ne.s32.totalorder %s303, %s319
      %p321 = scmp.eq.s32.totalorder %s49, 0
      %p322 = por %p320, %p321
      %s323 = ssub.s32 %s51, %s58
      %p324 = scmp.eq.s32.totalorder %s323, 0
      %s326 = sadd.s32 %s325, 1
      %s327 = scalar_select %p324, %s325, %s326
      %p330 = pneg %p324
      %p331 = scmp.eq.s32.totalorder %s43, 3
      %p332 = por %p330, %p331
      %p333 = scmp.ne.s32.totalorder %s325, %s328
      %p334 = scmp.eq.s32.totalorder %s43, 0
      %p335 = por %p333, %p334
      %p336 = scmp.ne.s32.totalorder %s325, %s328
      %p337 = scmp.eq.s32.totalorder %s48, 3
      %p338 = por %p336, %p337
      %p339 = scmp.ne.s32.totalorder %s328, %s329
      %p340 = scmp.eq.s32.totalorder %s48, 0
      %p341 = por %p339, %p340
      %p342 = scmp.ne.s32.totalorder %s328, %s329
      %p343 = scmp.eq.s32.totalorder %s49, 3
      %p344 = por %p342, %p343
      %p346 = scmp.ne.s32.totalorder %s329, %s345
      %p347 = scmp.eq.s32.totalorder %s49, 0
      %p348 = por %p346, %p347
      %s349 = ssub.s32 %s51, %s58
      %p350 = scmp.eq.s32.totalorder %s349, 0
      %s352 = sadd.s32 %s351, 1
      %s353 = scalar_select %p350, %s351, %s352
      %p356 = pneg %p350
      %p357 = scmp.eq.s32.totalorder %s43, 3
      %p358 = por %p356, %p357
      %p359 = scmp.ne.s32.totalorder %s351, %s354
      %p360 = scmp.eq.s32.totalorder %s43, 0
      %p361 = por %p359, %p360
      %p362 = scmp.ne.s32.totalorder %s351, %s354
      %p363 = scmp.eq.s32.totalorder %s48, 3
      %p364 = por %p362, %p363
      %p365 = scmp.ne.s32.totalorder %s354, %s355
      %p366 = scmp.eq.s32.totalorder %s48, 0
      %p367 = por %p365, %p366
      %p368 = scmp.ne.s32.totalorder %s354, %s355
      %p369 = scmp.eq.s32.totalorder %s49, 3
      %p370 = por %p368, %p369
      %p372 = scmp.ne.s32.totalorder %s355, %s371
      %p373 = scmp.eq.s32.totalorder %s49, 0
      %p374 = por %p372, %p373
      %s375 = ssub.s32 %s51, %s58
      %p376 = scmp.eq.s32.totalorder %s375, 0
      %s378 = sadd.s32 %s377, 1
      %s379 = scalar_select %p376, %s377, %s378
      %p382 = pneg %p376
      %p383 = scmp.eq.s32.totalorder %s43, 3
      %p384 = por %p382, %p383
      %p385 = scmp.ne.s32.totalorder %s377, %s380
      %p386 = scmp.eq.s32.totalorder %s43, 0
      %p387 = por %p385, %p386
      %p388 = scmp.ne.s32.totalorder %s377, %s380
      %p389 = scmp.eq.s32.totalorder %s48, 3
      %p390 = por %p388, %p389
      %p391 = scmp.ne.s32.totalorder %s380, %s381
      %p392 = scmp.eq.s32.totalorder %s48, 0
      %p393 = por %p391, %p392
      %p394 = scmp.ne.s32.totalorder %s380, %s381
      %p395 = scmp.eq.s32.totalorder %s49, 3
      %p396 = por %p394, %p395
      %p398 = scmp.ne.s32.totalorder %s381, %s397
      %p399 = scmp.eq.s32.totalorder %s49, 0
      %p400 = por %p398, %p399
      %s401 = ssub.s32 %s50, %s62
      %p402 = scmp.eq.s32.totalorder %s401, 0
      %s404 = sadd.s32 %s403, 1
      %s405 = scalar_select %p402, %s403, %s404
      %p408 = pneg %p402
      %p409 = scmp.eq.s32.totalorder %s43, 3
      %p410 = por %p408, %p409
      %p411 = scmp.ne.s32.totalorder %s403, %s406
      %p412 = scmp.eq.s32.totalorder %s43, 0
      %p413 = por %p411, %p412
      %p414 = scmp.ne.s32.totalorder %s403, %s406
      %p415 = scmp.eq.s32.totalorder %s48, 3
      %p416 = por %p414, %p415
      %p417 = scmp.ne.s32.totalorder %s406, %s407
      %p418 = scmp.eq.s32.totalorder %s48, 0
      %p419 = por %p417, %p418
      %p420 = scmp.ne.s32.totalorder %s406, %s407
      %p421 = scmp.eq.s32.totalorder %s49, 3
      %p422 = por %p420, %p421
      %p424 = scmp.ne.s32.totalorder %s407, %s423
      %p425 = scmp.eq.s32.totalorder %s49, 0
      %p426 = por %p424, %p425
      %p427 = scmp.le.s32.totalorder 1, %s43
      %p428 = scmp.lt.s32.totalorder %s43, 5
      %p429 = pnand %p427, %p428
      %p430 = pneg %p429
      // Predicated region
      $region9: #{encoder_forward.1} parent=5 // pred_check
        _
      $region10: #{encoder_forward.1} parent=5 // pred_check_branch
        %432 = sbr.rel (%p429) target = $region12
      $region11: #{encoder_forward.1} parent=5 // pred_region
        %s433 = ssub.s32 %s43, 1
      $region12: #{encoder_forward.1} parent=5 // pred_fallthru
        _
      %p434 = scmp.lt.s32.totalorder %s43, 4
      // Predicated region
      $region13: #{encoder_forward.1} parent=5 // pred_check
        %p435 = pneg %p434
      $region14: #{encoder_forward.1} parent=5 // pred_check_branch
        %437 = sbr.rel (%p435) target = $region16
      $region15: #{encoder_forward.1} parent=5 // pred_region
        // Predicated region
        $region17: #{encoder_forward.1} parent=15 // pred_check
          %p438 = pneg %p75
        $region18: #{encoder_forward.1} parent=15 // pred_check_branch
          %440 = sbr.rel (%p438) target = $region20
        $region19: #{encoder_forward.1} parent=15 // pred_region
          %s441 = sand.u32 %s65, 1
          %s442 = scalar_lea.sflag [#allocation3], %s441
          %s443 = sand.u32 %s65, 1
          %s444 = smul.addr %s443, 8
          %s445 = scalar_lea.vmem [#allocation2], %s444
          %s447 = ssub.s32 128, 128
          %448 = vsyncadd %s442, %s447
          %s449 = smul.addr %s50, 128
          %s450 = scalar_lea.hbm %s0, %s449
          %s452 = sshll.u32 %s445, 4
          %s453 = int_to_ptr.vmem [resolvable:$true] %s452
          %455 = dma.hbm_to_vmem [thread:$0]  %s450, 128, %s453, %s442
        $region20: #{encoder_forward.1} parent=15 // pred_fallthru
          _
        // Predicated region
        $region21: #{encoder_forward.1} parent=15 // pred_check
          %p456 = pneg %p101
        $region22: #{encoder_forward.1} parent=15 // pred_check_branch
          %458 = sbr.rel (%p456) target = $region24
        $region23: #{encoder_forward.1} parent=15 // pred_region
          %s459 = sand.u32 %s43, 1
          %s460 = scalar_lea.sflag [#allocation6], %s459
          %s461 = sand.u32 %s91, 1
          %s462 = smul.addr %s461, 16
          %s463 = scalar_lea.vmem [#allocation5], %s462
          %s465 = ssub.s32 256, 256
          %466 = vsyncadd %s460, %s465
          %s467 = smul.addr %s51, 4
          %s468 = smul.addr %s467, 64
          %s469 = scalar_lea.hbm %s1, %s468
          %s470 = sshll.u32 %s463, 4
          %s471 = int_to_ptr.vmem [resolvable:$true] %s470
          %476 = dma.hbm_to_vmem [thread:$0]  %s469, 256, %s471, %s460, 64, 64, 4
        $region24: #{encoder_forward.1} parent=15 // pred_fallthru
          _
        // Predicated region
        $region25: #{encoder_forward.1} parent=15 // pred_check
          %p477 = pneg %p127
        $region26: #{encoder_forward.1} parent=15 // pred_check_branch
          %479 = sbr.rel (%p477) target = $region28
        $region27: #{encoder_forward.1} parent=15 // pred_region
          %s480 = sand.u32 %s43, 1
          %s481 = scalar_lea.sflag [#allocation6], %s480
          %s482 = sand.u32 %s117, 1
          %s483 = scalar_lea.vmem [#allocation7], %s482
          %s485 = ssub.s32 16, 16
          %486 = vsyncadd %s481, %s485
          %s487 = smul.addr %s51, 16
          %s488 = scalar_lea.hbm %s2, %s487
          %s490 = sshll.u32 %s483, 4
          %s491 = int_to_ptr.vmem [resolvable:$true] %s490
          %493 = dma.hbm_to_vmem [thread:$0]  %s488, 16, %s491, %s481
        $region28: #{encoder_forward.1} parent=15 // pred_fallthru
          _
        // Predicated region
        $region29: #{encoder_forward.1} parent=15 // pred_check
          %p494 = pneg %p153
        $region30: #{encoder_forward.1} parent=15 // pred_check_branch
          %496 = sbr.rel (%p494) target = $region32
        $region31: #{encoder_forward.1} parent=15 // pred_region
          %s497 = sand.u32 %s43, 1
          %s498 = scalar_lea.sflag [#allocation9], %s497
          %s499 = sand.u32 %s143, 1
          %s500 = smul.addr %s499, 16
          %s501 = scalar_lea.vmem [#allocation8], %s500
          %s503 = ssub.s32 256, 256
          %504 = vsyncadd %s498, %s503
          %s505 = smul.addr %s51, 4
          %s506 = smul.addr %s505, 64
          %s507 = scalar_lea.hbm %s3, %s506
          %s508 = sshll.u32 %s501, 4
          %s509 = int_to_ptr.vmem [resolvable:$true] %s508
          %514 = dma.hbm_to_vmem [thread:$0]  %s507, 256, %s509, %s498, 64, 64, 4
        $region32: #{encoder_forward.1} parent=15 // pred_fallthru
          _
        // Predicated region
        $region33: #{encoder_forward.1} parent=15 // pred_check
          %p515 = pneg %p179
        $region34: #{encoder_forward.1} parent=15 // pred_check_branch
          %517 = sbr.rel (%p515) target = $region36
        $region35: #{encoder_forward.1} parent=15 // pred_region
          %s518 = sand.u32 %s43, 1
          %s519 = scalar_lea.sflag [#allocation9], %s518
          %s520 = sand.u32 %s169, 1
          %s521 = scalar_lea.vmem [#allocation10], %s520
          %s523 = ssub.s32 16, 16
          %524 = vsyncadd %s519, %s523
          %s525 = smul.addr %s51, 16
          %s526 = scalar_lea.hbm %s4, %s525
          %s528 = sshll.u32 %s521, 4
          %s529 = int_to_ptr.vmem [resolvable:$true] %s528
          %531 = dma.hbm_to_vmem [thread:$0]  %s526, 16, %s529, %s519
        $region36: #{encoder_forward.1} parent=15 // pred_fallthru
          _
        // Predicated region
        $region37: #{encoder_forward.1} parent=15 // pred_check
          %p532 = pneg %p205
        $region38: #{encoder_forward.1} parent=15 // pred_check_branch
          %534 = sbr.rel (%p532) target = $region40
        $region39: #{encoder_forward.1} parent=15 // pred_region
          %s535 = sand.u32 %s43, 1
          %s536 = scalar_lea.sflag [#allocation12], %s535
          %s537 = sand.u32 %s195, 1
          %s538 = smul.addr %s537, 16
          %s539 = scalar_lea.vmem [#allocation11], %s538
          %s541 = ssub.s32 256, 256
          %542 = vsyncadd %s536, %s541
          %s543 = smul.addr %s51, 4
          %s544 = smul.addr %s543, 64
          %s545 = scalar_lea.hbm %s5, %s544
          %s546 = sshll.u32 %s539, 4
          %s547 = int_to_ptr.vmem [resolvable:$true] %s546
          %552 = dma.hbm_to_vmem [thread:$0]  %s545, 256, %s547, %s536, 64, 64, 4
        $region40: #{encoder_forward.1} parent=15 // pred_fallthru
          _
        // Predicated region
        $region41: #{encoder_forward.1} parent=15 // pred_check
          %p553 = pneg %p231
        $region42: #{encoder_forward.1} parent=15 // pred_check_branch
          %555 = sbr.rel (%p553) target = $region44
        $region43: #{encoder_forward.1} parent=15 // pred_region
          %s556 = sand.u32 %s43, 1
          %s557 = scalar_lea.sflag [#allocation12], %s556
          %s558 = sand.u32 %s221, 1
          %s559 = scalar_lea.vmem [#allocation13], %s558
          %s561 = ssub.s32 16, 16
          %562 = vsyncadd %s557, %s561
          %s563 = smul.addr %s51, 16
          %s564 = scalar_lea.hbm %s6, %s563
          %s566 = sshll.u32 %s559, 4
          %s567 = int_to_ptr.vmem [resolvable:$true] %s566
          %569 = dma.hbm_to_vmem [thread:$0]  %s564, 16, %s567, %s557
        $region44: #{encoder_forward.1} parent=15 // pred_fallthru
          _
        // Predicated region
        $region45: #{encoder_forward.1} parent=15 // pred_check
          %p570 = pneg %p257
        $region46: #{encoder_forward.1} parent=15 // pred_check_branch
          %572 = sbr.rel (%p570) target = $region48
        $region47: #{encoder_forward.1} parent=15 // pred_region
          %s573 = sand.u32 %s43, 1
          %s574 = scalar_lea.sflag [#allocation15], %s573
          %s575 = sand.u32 %s247, 1
          %s576 = smul.addr %s575, 32
          %s577 = scalar_lea.vmem [#allocation14], %s576
          %s579 = ssub.s32 512, 512
          %580 = vsyncadd %s574, %s579
          %s581 = smul.addr %s51, 8
          %s582 = smul.addr %s581, 64
          %s583 = scalar_lea.hbm %s7, %s582
          %s584 = sshll.u32 %s577, 4
          %s585 = int_to_ptr.vmem [resolvable:$true] %s584
          %590 = dma.hbm_to_vmem [thread:$0]  %s583, 512, %s585, %s574, 64, 64, 4
        $region48: #{encoder_forward.1} parent=15 // pred_fallthru
          _
        // Predicated region
        $region49: #{encoder_forward.1} parent=15 // pred_check
          %p591 = pneg %p283
        $region50: #{encoder_forward.1} parent=15 // pred_check_branch
          %593 = sbr.rel (%p591) target = $region52
        $region51: #{encoder_forward.1} parent=15 // pred_region
          %s594 = sand.u32 %s43, 1
          %s595 = scalar_lea.sflag [#allocation15], %s594
          %s596 = sand.u32 %s273, 1
          %s597 = scalar_lea.vmem [#allocation16], %s596
          %s599 = ssub.s32 16, 16
          %600 = vsyncadd %s595, %s599
          %s601 = smul.addr %s51, 16
          %s602 = scalar_lea.hbm %s8, %s601
          %s604 = sshll.u32 %s597, 4
          %s605 = int_to_ptr.vmem [resolvable:$true] %s604
          %607 = dma.hbm_to_vmem [thread:$0]  %s602, 16, %s605, %s595
        $region52: #{encoder_forward.1} parent=15 // pred_fallthru
          _
        // Predicated region
        $region53: #{encoder_forward.1} parent=15 // pred_check
          %p608 = pneg %p309
        $region54: #{encoder_forward.1} parent=15 // pred_check_branch
          %610 = sbr.rel (%p608) target = $region56
        $region55: #{encoder_forward.1} parent=15 // pred_region
          %s611 = sand.u32 %s43, 1
          %s612 = scalar_lea.sflag [#allocation18], %s611
          %s613 = sand.u32 %s299, 1
          %s614 = scalar_lea.vmem [#allocation17], %s613
          %s616 = ssub.s32 16, 16
          %617 = vsyncadd %s612, %s616
          %s618 = smul.addr %s51, 16
          %s619 = scalar_lea.hbm %s9, %s618
          %s621 = sshll.u32 %s614, 4
          %s622 = int_to_ptr.vmem [resolvable:$true] %s621
          %624 = dma.hbm_to_vmem [thread:$0]  %s619, 16, %s622, %s612
        $region56: #{encoder_forward.1} parent=15 // pred_fallthru
          _
        // Predicated region
        $region57: #{encoder_forward.1} parent=15 // pred_check
          %p625 = pneg %p335
        $region58: #{encoder_forward.1} parent=15 // pred_check_branch
          %627 = sbr.rel (%p625) target = $region60
        $region59: #{encoder_forward.1} parent=15 // pred_region
          %s628 = sand.u32 %s43, 1
          %s629 = scalar_lea.sflag [#allocation18], %s628
          %s630 = sand.u32 %s325, 1
          %s631 = scalar_lea.vmem [#allocation19], %s630
          %s633 = ssub.s32 16, 16
          %634 = vsyncadd %s629, %s633
          %s635 = smul.addr %s51, 16
          %s636 = scalar_lea.hbm %s10, %s635
          %s638 = sshll.u32 %s631, 4
          %s639 = int_to_ptr.vmem [resolvable:$true] %s638
          %641 = dma.hbm_to_vmem [thread:$0]  %s636, 16, %s639, %s629
        $region60: #{encoder_forward.1} parent=15 // pred_fallthru
          _
        // Predicated region
        $region61: #{encoder_forward.1} parent=15 // pred_check
          %p642 = pneg %p361
        $region62: #{encoder_forward.1} parent=15 // pred_check_branch
          %644 = sbr.rel (%p642) target = $region64
        $region63: #{encoder_forward.1} parent=15 // pred_region
          %s645 = sand.u32 %s43, 1
          %s646 = scalar_lea.sflag [#allocation21], %s645
          %s647 = sand.u32 %s351, 1
          %s648 = scalar_lea.vmem [#allocation20], %s647
          %s650 = ssub.s32 16, 16
          %651 = vsyncadd %s646, %s650
          %s652 = smul.addr %s51, 16
          %s653 = scalar_lea.hbm %s11, %s652
          %s655 = sshll.u32 %s648, 4
          %s656 = int_to_ptr.vmem [resolvable:$true] %s655
          %658 = dma.hbm_to_vmem [thread:$0]  %s653, 16, %s656, %s646
        $region64: #{encoder_forward.1} parent=15 // pred_fallthru
          _
        // Predicated region
        $region65: #{encoder_forward.1} parent=15 // pred_check
          %p659 = pneg %p387
        $region66: #{encoder_forward.1} parent=15 // pred_check_branch
          %661 = sbr.rel (%p659) target = $region68
        $region67: #{encoder_forward.1} parent=15 // pred_region
          %s662 = sand.u32 %s43, 1
          %s663 = scalar_lea.sflag [#allocation21], %s662
          %s664 = sand.u32 %s377, 1
          %s665 = scalar_lea.vmem [#allocation22], %s664
          %s667 = ssub.s32 16, 16
          %668 = vsyncadd %s663, %s667
          %s669 = smul.addr %s51, 16
          %s670 = scalar_lea.hbm %s12, %s669
          %s672 = sshll.u32 %s665, 4
          %s673 = int_to_ptr.vmem [resolvable:$true] %s672
          %675 = dma.hbm_to_vmem [thread:$0]  %s670, 16, %s673, %s663
        $region68: #{encoder_forward.1} parent=15 // pred_fallthru
          _
      $region16: #{encoder_forward.1} parent=5 // pred_fallthru
        _
      %p676 = scmp.le.s32.totalorder 1, %s43
      %p677 = scmp.lt.s32.totalorder %s43, 5
      %p678 = pnand %p676, %p677
      %p679 = pneg %p678
      // Predicated region
      $region69: #{encoder_forward.1} parent=5 // pred_check
        _
      $region70: #{encoder_forward.1} parent=5 // pred_check_branch
        %681 = sbr.rel (%p678) target = $region72
      $region71: #{encoder_forward.1} parent=5 // pred_region
        %s682 = ssub.s32 %s43, 1
        %s683 = sand.u32 %s68, 1
        %s684 = scalar_lea.sflag [#allocation3], %s683
        %s685 = sand.u32 %s68, 1
        %s686 = smul.addr %s685, 8
        %s687 = scalar_lea.vmem [#allocation2], %s686
        // Predicated region
        $region73: #{encoder_forward.1} parent=71 // pred_check
          %p688 = pneg %p81
        $region74: #{encoder_forward.1} parent=71 // pred_check_branch
          %690 = sbr.rel (%p688) target = $region76
        $region75: #{encoder_forward.1} parent=71 // pred_region
          %691 = dma.done %s684, 128
        $region76: #{encoder_forward.1} parent=71 // pred_fallthru
          _
        %s692 = sand.u32 %s48, 1
        %s693 = scalar_lea.sflag [#allocation6], %s692
        %s694 = sand.u32 %s94, 1
        %s695 = smul.addr %s694, 16
        %s696 = scalar_lea.vmem [#allocation5], %s695
        // Predicated region
        $region77: #{encoder_forward.1} parent=71 // pred_check
          %p697 = pneg %p107
        $region78: #{encoder_forward.1} parent=71 // pred_check_branch
          %699 = sbr.rel (%p697) target = $region80
        $region79: #{encoder_forward.1} parent=71 // pred_region
          %700 = dma.done %s693, 256
        $region80: #{encoder_forward.1} parent=71 // pred_fallthru
          _
        %s701 = sand.u32 %s48, 1
        %s702 = scalar_lea.sflag [#allocation6], %s701
        %s703 = sand.u32 %s120, 1
        %s704 = scalar_lea.vmem [#allocation7], %s703
        // Predicated region
        $region81: #{encoder_forward.1} parent=71 // pred_check
          %p705 = pneg %p133
        $region82: #{encoder_forward.1} parent=71 // pred_check_branch
          %707 = sbr.rel (%p705) target = $region84
        $region83: #{encoder_forward.1} parent=71 // pred_region
          %708 = dma.done %s702, 16
        $region84: #{encoder_forward.1} parent=71 // pred_fallthru
          _
        %s709 = sand.u32 %s48, 1
        %s710 = scalar_lea.sflag [#allocation9], %s709
        %s711 = sand.u32 %s146, 1
        %s712 = smul.addr %s711, 16
        %s713 = scalar_lea.vmem [#allocation8], %s712
        // Predicated region
        $region85: #{encoder_forward.1} parent=71 // pred_check
          %p714 = pneg %p159
        $region86: #{encoder_forward.1} parent=71 // pred_check_branch
          %716 = sbr.rel (%p714) target = $region88
        $region87: #{encoder_forward.1} parent=71 // pred_region
          %717 = dma.done %s710, 256
        $region88: #{encoder_forward.1} parent=71 // pred_fallthru
          _
        %s718 = sand.u32 %s48, 1
        %s719 = scalar_lea.sflag [#allocation9], %s718
        %s720 = sand.u32 %s172, 1
        %s721 = scalar_lea.vmem [#allocation10], %s720
        // Predicated region
        $region89: #{encoder_forward.1} parent=71 // pred_check
          %p722 = pneg %p185
        $region90: #{encoder_forward.1} parent=71 // pred_check_branch
          %724 = sbr.rel (%p722) target = $region92
        $region91: #{encoder_forward.1} parent=71 // pred_region
          %725 = dma.done %s719, 16
        $region92: #{encoder_forward.1} parent=71 // pred_fallthru
          _
        %s726 = sand.u32 %s48, 1
        %s727 = scalar_lea.sflag [#allocation12], %s726
        %s728 = sand.u32 %s198, 1
        %s729 = smul.addr %s728, 16
        %s730 = scalar_lea.vmem [#allocation11], %s729
        // Predicated region
        $region93: #{encoder_forward.1} parent=71 // pred_check
          %p731 = pneg %p211
        $region94: #{encoder_forward.1} parent=71 // pred_check_branch
          %733 = sbr.rel (%p731) target = $region96
        $region95: #{encoder_forward.1} parent=71 // pred_region
          %734 = dma.done %s727, 256
        $region96: #{encoder_forward.1} parent=71 // pred_fallthru
          _
        %s735 = sand.u32 %s48, 1
        %s736 = scalar_lea.sflag [#allocation12], %s735
        %s737 = sand.u32 %s224, 1
        %s738 = scalar_lea.vmem [#allocation13], %s737
        // Predicated region
        $region97: #{encoder_forward.1} parent=71 // pred_check
          %p739 = pneg %p237
        $region98: #{encoder_forward.1} parent=71 // pred_check_branch
          %741 = sbr.rel (%p739) target = $region100
        $region99: #{encoder_forward.1} parent=71 // pred_region
          %742 = dma.done %s736, 16
        $region100: #{encoder_forward.1} parent=71 // pred_fallthru
          _
        %s743 = sand.u32 %s48, 1
        %s744 = scalar_lea.sflag [#allocation15], %s743
        %s745 = sand.u32 %s250, 1
        %s746 = smul.addr %s745, 32
        %s747 = scalar_lea.vmem [#allocation14], %s746
        // Predicated region
        $region101: #{encoder_forward.1} parent=71 // pred_check
          %p748 = pneg %p263
        $region102: #{encoder_forward.1} parent=71 // pred_check_branch
          %750 = sbr.rel (%p748) target = $region104
        $region103: #{encoder_forward.1} parent=71 // pred_region
          %751 = dma.done %s744, 512
        $region104: #{encoder_forward.1} parent=71 // pred_fallthru
          _
        %s752 = sand.u32 %s48, 1
        %s753 = scalar_lea.sflag [#allocation15], %s752
        %s754 = sand.u32 %s276, 1
        %s755 = scalar_lea.vmem [#allocation16], %s754
        // Predicated region
        $region105: #{encoder_forward.1} parent=71 // pred_check
          %p756 = pneg %p289
        $region106: #{encoder_forward.1} parent=71 // pred_check_branch
          %758 = sbr.rel (%p756) target = $region108
        $region107: #{encoder_forward.1} parent=71 // pred_region
          %759 = dma.done %s753, 16
        $region108: #{encoder_forward.1} parent=71 // pred_fallthru
          _
        %s760 = sand.u32 %s48, 1
        %s761 = scalar_lea.sflag [#allocation18], %s760
        %s762 = sand.u32 %s302, 1
        %s763 = scalar_lea.vmem [#allocation17], %s762
        // Predicated region
        $region109: #{encoder_forward.1} parent=71 // pred_check
          %p764 = pneg %p315
        $region110: #{encoder_forward.1} parent=71 // pred_check_branch
          %766 = sbr.rel (%p764) target = $region112
        $region111: #{encoder_forward.1} parent=71 // pred_region
          %767 = dma.done %s761, 16
        $region112: #{encoder_forward.1} parent=71 // pred_fallthru
          _
        %s768 = sand.u32 %s48, 1
        %s769 = scalar_lea.sflag [#allocation18], %s768
        %s770 = sand.u32 %s328, 1
        %s771 = scalar_lea.vmem [#allocation19], %s770
        // Predicated region
        $region113: #{encoder_forward.1} parent=71 // pred_check
          %p772 = pneg %p341
        $region114: #{encoder_forward.1} parent=71 // pred_check_branch
          %774 = sbr.rel (%p772) target = $region116
        $region115: #{encoder_forward.1} parent=71 // pred_region
          %775 = dma.done %s769, 16
        $region116: #{encoder_forward.1} parent=71 // pred_fallthru
          _
        %s776 = sand.u32 %s48, 1
        %s777 = scalar_lea.sflag [#allocation21], %s776
        %s778 = sand.u32 %s354, 1
        %s779 = scalar_lea.vmem [#allocation20], %s778
        // Predicated region
        $region117: #{encoder_forward.1} parent=71 // pred_check
          %p780 = pneg %p367
        $region118: #{encoder_forward.1} parent=71 // pred_check_branch
          %782 = sbr.rel (%p780) target = $region120
        $region119: #{encoder_forward.1} parent=71 // pred_region
          %783 = dma.done %s777, 16
        $region120: #{encoder_forward.1} parent=71 // pred_fallthru
          _
        %s784 = sand.u32 %s48, 1
        %s785 = scalar_lea.sflag [#allocation21], %s784
        %s786 = sand.u32 %s380, 1
        %s787 = scalar_lea.vmem [#allocation22], %s786
        // Predicated region
        $region121: #{encoder_forward.1} parent=71 // pred_check
          %p788 = pneg %p393
        $region122: #{encoder_forward.1} parent=71 // pred_check_branch
          %790 = sbr.rel (%p788) target = $region124
        $region123: #{encoder_forward.1} parent=71 // pred_region
          %791 = dma.done %s785, 16
        $region124: #{encoder_forward.1} parent=71 // pred_fallthru
          _
        %s792 = sand.u32 %s68, 1
        %s793 = scalar_lea.sflag [#allocation3], %s792
        %s794 = sand.u32 %s68, 1
        %s795 = smul.addr %s794, 8
        %s796 = scalar_lea.vmem [#allocation2], %s795
        %p797 = pneg %p81
        %p798 = pneg %p78
        %s799 = sand.u32 %s48, 1
        %s800 = scalar_lea.sflag [#allocation6], %s799
        %s801 = sand.u32 %s94, 1
        %s802 = smul.addr %s801, 16
        %s803 = scalar_lea.vmem [#allocation5], %s802
        %p804 = pneg %p107
        %p805 = pneg %p104
        %s806 = sand.u32 %s48, 1
        %s807 = scalar_lea.sflag [#allocation6], %s806
        %s808 = sand.u32 %s120, 1
        %s809 = scalar_lea.vmem [#allocation7], %s808
        %p810 = pneg %p133
        %p811 = pneg %p130
        %s812 = sand.u32 %s48, 1
        %s813 = scalar_lea.sflag [#allocation9], %s812
        %s814 = sand.u32 %s146, 1
        %s815 = smul.addr %s814, 16
        %s816 = scalar_lea.vmem [#allocation8], %s815
        %p817 = pneg %p159
        %p818 = pneg %p156
        %s819 = sand.u32 %s48, 1
        %s820 = scalar_lea.sflag [#allocation9], %s819
        %s821 = sand.u32 %s172, 1
        %s822 = scalar_lea.vmem [#allocation10], %s821
        %p823 = pneg %p185
        %p824 = pneg %p182
        %s825 = sand.u32 %s48, 1
        %s826 = scalar_lea.sflag [#allocation12], %s825
        %s827 = sand.u32 %s198, 1
        %s828 = smul.addr %s827, 16
        %s829 = scalar_lea.vmem [#allocation11], %s828
        %p830 = pneg %p211
        %p831 = pneg %p208
        %s832 = sand.u32 %s48, 1
        %s833 = scalar_lea.sflag [#allocation12], %s832
        %s834 = sand.u32 %s224, 1
        %s835 = scalar_lea.vmem [#allocation13], %s834
        %p836 = pneg %p237
        %p837 = pneg %p234
        %s838 = sand.u32 %s48, 1
        %s839 = scalar_lea.sflag [#allocation15], %s838
        %s840 = sand.u32 %s250, 1
        %s841 = smul.addr %s840, 32
        %s842 = scalar_lea.vmem [#allocation14], %s841
        %p843 = pneg %p263
        %p844 = pneg %p260
        %s845 = sand.u32 %s48, 1
        %s846 = scalar_lea.sflag [#allocation15], %s845
        %s847 = sand.u32 %s276, 1
        %s848 = scalar_lea.vmem [#allocation16], %s847
        %p849 = pneg %p289
        %p850 = pneg %p286
        %s851 = sand.u32 %s48, 1
        %s852 = scalar_lea.sflag [#allocation18], %s851
        %s853 = sand.u32 %s302, 1
        %s854 = scalar_lea.vmem [#allocation17], %s853
        %p855 = pneg %p315
        %p856 = pneg %p312
        %s857 = sand.u32 %s48, 1
        %s858 = scalar_lea.sflag [#allocation18], %s857
        %s859 = sand.u32 %s328, 1
        %s860 = scalar_lea.vmem [#allocation19], %s859
        %p861 = pneg %p341
        %p862 = pneg %p338
        %s863 = sand.u32 %s48, 1
        %s864 = scalar_lea.sflag [#allocation21], %s863
        %s865 = sand.u32 %s354, 1
        %s866 = scalar_lea.vmem [#allocation20], %s865
        %p867 = pneg %p367
        %p868 = pneg %p364
        %s869 = sand.u32 %s48, 1
        %s870 = scalar_lea.sflag [#allocation21], %s869
        %s871 = sand.u32 %s380, 1
        %s872 = scalar_lea.vmem [#allocation22], %s871
        %p873 = pneg %p393
        %p874 = pneg %p390
        %p875 = pneg %p419
        %p876 = pneg %p416
        %s877 = sand.u32 %s406, 1
        %s878 = scalar_lea.sflag [#allocation4], %s877
        %s879 = sand.u32 %s406, 1
        %s880 = smul.addr %s879, 8
        %s881 = scalar_lea.vmem [#allocation23], %s880
        %p883 = scmp.eq.s32.totalorder %s53, 0
        // Predicated region
        $region125: #{encoder_forward.1} parent=71 // pred_check
          %p884 = pneg %p883
        $region126: #{encoder_forward.1} parent=71 // pred_check_branch
          %886 = sbr.rel (%p884) target = $region128
        $region127: #{encoder_forward.1} parent=71 // pred_region
          %v887 = vld [vmem:[%s687] sm:$0xff]
          %vm888 = vcmask 261120
          %889 = vst.msk [vmem:[%s881] sm:$0xff] %vm888, %v887
        $region128: #{encoder_forward.1} parent=71 // pred_fallthru
          _
        %v890 = vld [vmem:[%s881] sm:$0xff]
        %v891 = vpack.c.bf16 %v890, %v890
        %v892 = vld [vmem:[%s696] sm:$0xf]
        %v893 = vld [vmem:[%s696 + $0x4] sm:$0xf]
        %v894 = vld [vmem:[%s696 + $0x8] sm:$0xf]
        %v895 = vld [vmem:[%s696 + $0xc] sm:$0xf]
        %v896 = vld [vmem:[%s704] sm:$0x1]
        %v898 = vlaneseq
        %v899 = vshrl.u32 %v898, 7
        %v900 = vsub.s32 0, %v899
        %v901 = vrot.slane %v896, %v900
        %v907 = vunpack.c.l.b16 %v892
        %v908 = vunpack.c.l.b16 %v893
        %v909 = vunpack.c.l.b16 %v894
        %v910 = vunpack.c.l.b16 %v895
        %v911 = vpack.c.b16 %v908, %v907
        %v912 = vpack.c.b16 %v910, %v909
        %vm915 = vcmask 261120
        %v917 = vsel %vm915, %v891, 0
        %919 = vmatprep.subr.bf16.mxu0 0
        %920 = vmatpush1.bf16.msra.mxu0 %v911
        %921 = vmatprep.subr.bf16.mxu0 0
        %922 = vmatpush1.bf16.msra.mxu0 %v912
        %923 = vmatprep.subr.bf16.mxu0 0
        %924 = vmatpush1.bf16.msra.mxu0 0
        %925 = vmatprep.subr.bf16.mxu0 0
        %926 = vmatpush1.bf16.msra.mxu0 0
        %927 = vmatprep.subr.bf16.mxu0 0
        %928 = vmatpush1.bf16.msra.mxu0 0
        %929 = vmatprep.subr.bf16.mxu0 0
        %930 = vmatpush1.bf16.msra.mxu0 0
        %931 = vmatprep.subr.bf16.mxu0 0
        %932 = vmatpush1.bf16.msra.mxu0 0
        %933 = vmatprep.subr.bf16.mxu0 0
        %934 = vmatpush1.bf16.msra.mxu0 0
        %935 = vmatprep.subr.bf16.mxu0 0
        %936 = vmatpush1.bf16.msra.mxu0 0
        %937 = vmatprep.subr.bf16.mxu0 0
        %938 = vmatpush1.bf16.msra.mxu0 0
        %939 = vmatprep.subr.bf16.mxu0 0
        %940 = vmatpush1.bf16.msra.mxu0 0
        %941 = vmatprep.subr.bf16.mxu0 0
        %942 = vmatpush1.bf16.msra.mxu0 0
        %943 = vmatprep.subr.bf16.mxu0 0
        %944 = vmatpush1.bf16.msra.mxu0 0
        %945 = vmatprep.subr.bf16.mxu0 0
        %946 = vmatpush1.bf16.msra.mxu0 0
        %947 = vmatprep.subr.bf16.mxu0 0
        %948 = vmatpush1.bf16.msra.mxu0 0
        %949 = vmatprep.subr.bf16.mxu0 0
        %950 = vmatpush1.bf16.msra.mxu0 0
        %951 = vmatprep.mubr.bf16.mxu0 0
        %952 = vmatmul.mubr.bf16.gmra.mrb[0].mxu0 %v917
        %v953 = vpop.f32.mrb[0].mxu0
        %v954 = vadd.f32 %v901, %v953
        %v955 = vpop.f32.mrb[0].mxu0
        %v956 = vpop.f32.mrb[0].mxu0
        %v957 = vpop.f32.mrb[0].mxu0
        %958 = vdwg.mxu0
        %960 = vrot.lane.b32.xlu0 %v954, 120
        %v961 = vpop.permute.xlu0 %960
        %963 = vrot.lane.b32.xlu0 %v954, 112
        %v964 = vpop.permute.xlu0 %963
        %966 = vrot.lane.b32.xlu0 %v954, 104
        %v967 = vpop.permute.xlu0 %966
        %v969 = vpack.c.bf16 %v954, %v954
        %v970 = vpack.c.bf16 %v961, %v961
        %v971 = vpack.c.bf16 %v964, %v964
        %v972 = vpack.c.bf16 %v967, %v967
        %974 = vrot.lane.b32.xlu0 %v969, 96
        %v975 = vpop.permute.xlu0 %974
        %vm976 = vcmask 64512
        %v978 = vsel %vm976, %v969, 0
        %v981 = vsel %vm976, %v975, 0
        %983 = vmatprep.subr.bf16.mxu0 0
        %984 = vmatpush1.bf16.xpose.msra.mxu0 %v981
        %985 = vmatprep.subr.bf16.mxu0 0
        %986 = vmatpush1.bf16.xpose.msra.mxu0 0
        %987 = vmatprep.subr.bf16.mxu0 0
        %988 = vmatpush1.bf16.xpose.msra.mxu0 0
        %989 = vmatprep.subr.bf16.mxu0 0
        %990 = vmatpush1.bf16.xpose.msra.mxu0 0
        %991 = vmatprep.subr.bf16.mxu0 0
        %992 = vmatpush1.bf16.xpose.msra.mxu0 0
        %993 = vmatprep.subr.bf16.mxu0 0
        %994 = vmatpush1.bf16.xpose.msra.mxu0 0
        %995 = vmatprep.subr.bf16.mxu0 0
        %996 = vmatpush1.bf16.xpose.msra.mxu0 0
        %997 = vmatprep.subr.bf16.mxu0 0
        %998 = vmatpush1.bf16.xpose.msra.mxu0 0
        %999 = vmatprep.subr.bf16.mxu0 0
        %1000 = vmatpush1.bf16.xpose.msra.mxu0 0
        %1001 = vmatprep.subr.bf16.mxu0 0
        %1002 = vmatpush1.bf16.xpose.msra.mxu0 0
        %1003 = vmatprep.subr.bf16.mxu0 0
        %1004 = vmatpush1.bf16.xpose.msra.mxu0 0
        %1005 = vmatprep.subr.bf16.mxu0 0
        %1006 = vmatpush1.bf16.xpose.msra.mxu0 0
        %1007 = vmatprep.subr.bf16.mxu0 0
        %1008 = vmatpush1.bf16.xpose.msra.mxu0 0
        %1009 = vmatprep.subr.bf16.mxu0 0
        %1010 = vmatpush1.bf16.xpose.msra.mxu0 0
        %1011 = vmatprep.subr.bf16.mxu0 0
        %1012 = vmatpush1.bf16.xpose.msra.mxu0 0
        %1013 = vmatprep.subr.bf16.mxu0 0
        %1014 = vmatpush1.bf16.xpose.msra.mxu0 0
        %1015 = vmatprep.mubr.bf16.mxu0 0
        %1016 = vmatmul.mubr.bf16.gmra.mrb[0].mxu0 %v978
        %v1017 = vpop.f32.mrb[0].mxu0
        %v1018 = vadd.f32 0.0, %v1017
        %v1019 = vpop.f32.mrb[0].mxu0
        %v1020 = vpop.f32.mrb[0].mxu0
        %v1021 = vpop.f32.mrb[0].mxu0
        %1022 = vdwg.mxu0
        %1024 = vrot.lane.b32.xlu0 %v970, 96
        %v1025 = vpop.permute.xlu0 %1024
        %v1027 = vsel %vm976, %v970, 0
        %v1030 = vsel %vm976, %v1025, 0
        %1032 = vmatprep.subr.bf16.mxu0 0
        %1033 = vmatpush1.bf16.xpose.msra.mxu0 %v1030
        %1034 = vmatprep.subr.bf16.mxu0 0
        %1035 = vmatpush1.bf16.xpose.msra.mxu0 0
        %1036 = vmatprep.subr.bf16.mxu0 0
        %1037 = vmatpush1.bf16.xpose.msra.mxu0 0
        %1038 = vmatprep.subr.bf16.mxu0 0
        %1039 = vmatpush1.bf16.xpose.msra.mxu0 0
        %1040 = vmatprep.subr.bf16.mxu0 0
        %1041 = vmatpush1.bf16.xpose.msra.mxu0 0
        %1042 = vmatprep.subr.bf16.mxu0 0
        %1043 = vmatpush1.bf16.xpose.msra.mxu0 0
        %1044 = vmatprep.subr.bf16.mxu0 0
        %1045 = vmatpush1.bf16.xpose.msra.mxu0 0
        %1046 = vmatprep.subr.bf16.mxu0 0
        %1047 = vmatpush1.bf16.xpose.msra.mxu0 0
        %1048 = vmatprep.subr.bf16.mxu0 0
        %1049 = vmatpush1.bf16.xpose.msra.mxu0 0
        %1050 = vmatprep.subr.bf16.mxu0 0
        %1051 = vmatpush1.bf16.xpose.msra.mxu0 0
        %1052 = vmatprep.subr.bf16.mxu0 0
        %1053 = vmatpush1.bf16.xpose.msra.mxu0 0
        %1054 = vmatprep.subr.bf16.mxu0 0
        %1055 = vmatpush1.bf16.xpose.msra.mxu0 0
        %1056 = vmatprep.subr.bf16.mxu0 0
        %1057 = vmatpush1.bf16.xpose.msra.mxu0 0
        %1058 = vmatprep.subr.bf16.mxu0 0
        %1059 = vmatpush1.bf16.xpose.msra.mxu0 0
        %1060 = vmatprep.subr.bf16.mxu0 0
        %1061 = vmatpush1.bf16.xpose.msra.mxu0 0
        %1062 = vmatprep.subr.bf16.mxu0 0
        %1063 = vmatpush1.bf16.xpose.msra.mxu0 0
        %1064 = vmatprep.mubr.bf16.mxu0 0
        %1065 = vmatmul.mubr.bf16.gmra.mrb[0].mxu0 %v1027
        %v1066 = vpop.f32.mrb[0].mxu0
        %v1067 = vadd.f32 0.0, %v1066
        %v1068 = vpop.f32.mrb[0].mxu0
        %v1069 = vpop.f32.mrb[0].mxu0
        %v1070 = vpop.f32.mrb[0].mxu0
        %1071 = vdwg.mxu0
        %1073 = vrot.lane.b32.xlu0 %v971, 96
        %v1074 = vpop.permute.xlu0 %1073
        %v1076 = vsel %vm976, %v971, 0
        %v1079 = vsel %vm976, %v1074, 0
        %1081 = vmatprep.subr.bf16.mxu0 0
        %1082 = vmatpush1.bf16.xpose.msra.mxu0 %v1079
        %1083 = vmatprep.subr.bf16.mxu0 0
        %1084 = vmatpush1.bf16.xpose.msra.mxu0 0
        %1085 = vmatprep.subr.bf16.mxu0 0
        %1086 = vmatpush1.bf16.xpose.msra.mxu0 0
        %1087 = vmatprep.subr.bf16.mxu0 0
        %1088 = vmatpush1.bf16.xpose.msra.mxu0 0
        %1089 = vmatprep.subr.bf16.mxu0 0
        %1090 = vmatpush1.bf16.xpose.msra.mxu0 0
        %1091 = vmatprep.subr.bf16.mxu0 0
        %1092 = vmatpush1.bf16.xpose.msra.mxu0 0
        %1093 = vmatprep.subr.bf16.mxu0 0
        %1094 = vmatpush1.bf16.xpose.msra.mxu0 0
        %1095 = vmatprep.subr.bf16.mxu0 0
        %1096 = vmatpush1.bf16.xpose.msra.mxu0 0
        %1097 = vmatprep.subr.bf16.mxu0 0
        %1098 = vmatpush1.bf16.xpose.msra.mxu0 0
        %1099 = vmatprep.subr.bf16.mxu0 0
        %1100 = vmatpush1.bf16.xpose.msra.mxu0 0
        %1101 = vmatprep.subr.bf16.mxu0 0
        %1102 = vmatpush1.bf16.xpose.msra.mxu0 0
        %1103 = vmatprep.subr.bf16.mxu0 0
        %1104 = vmatpush1.bf16.xpose.msra.mxu0 0
        %1105 = vmatprep.subr.bf16.mxu0 0
        %1106 = vmatpush1.bf16.xpose.msra.mxu0 0
        %1107 = vmatprep.subr.bf16.mxu0 0
        %1108 = vmatpush1.bf16.xpose.msra.mxu0 0
        %1109 = vmatprep.subr.bf16.mxu0 0
        %1110 = vmatpush1.bf16.xpose.msra.mxu0 0
        %1111 = vmatprep.subr.bf16.mxu0 0
        %1112 = vmatpush1.bf16.xpose.msra.mxu0 0
        %1113 = vmatprep.mubr.bf16.mxu0 0
        %1114 = vmatmul.mubr.bf16.gmra.mrb[0].mxu0 %v1076
        %v1115 = vpop.f32.mrb[0].mxu0
        %v1116 = vadd.f32 0.0, %v1115
        %v1117 = vpop.f32.mrb[0].mxu0
        %v1118 = vpop.f32.mrb[0].mxu0
        %v1119 = vpop.f32.mrb[0].mxu0
        %1120 = vdwg.mxu0
        %1122 = vrot.lane.b32.xlu0 %v972, 96
        %v1123 = vpop.permute.xlu0 %1122
        %v1125 = vsel %vm976, %v972, 0
        %v1128 = vsel %vm976, %v1123, 0
        %1130 = vmatprep.subr.bf16.mxu0 0
        %1131 = vmatpush1.bf16.xpose.msra.mxu0 %v1128
        %1132 = vmatprep.subr.bf16.mxu0 0
        %1133 = vmatpush1.bf16.xpose.msra.mxu0 0
        %1134 = vmatprep.subr.bf16.mxu0 0
        %1135 = vmatpush1.bf16.xpose.msra.mxu0 0
        %1136 = vmatprep.subr.bf16.mxu0 0
        %1137 = vmatpush1.bf16.xpose.msra.mxu0 0
        %1138 = vmatprep.subr.bf16.mxu0 0
        %1139 = vmatpush1.bf16.xpose.msra.mxu0 0
        %1140 = vmatprep.subr.bf16.mxu0 0
        %1141 = vmatpush1.bf16.xpose.msra.mxu0 0
        %1142 = vmatprep.subr.bf16.mxu0 0
        %1143 = vmatpush1.bf16.xpose.msra.mxu0 0
        %1144 = vmatprep.subr.bf16.mxu0 0
        %1145 = vmatpush1.bf16.xpose.msra.mxu0 0
        %1146 = vmatprep.subr.bf16.mxu0 0
        %1147 = vmatpush1.bf16.xpose.msra.mxu0 0
        %1148 = vmatprep.subr.bf16.mxu0 0
        %1149 = vmatpush1.bf16.xpose.msra.mxu0 0
        %1150 = vmatprep.subr.bf16.mxu0 0
        %1151 = vmatpush1.bf16.xpose.msra.mxu0 0
        %1152 = vmatprep.subr.bf16.mxu0 0
        %1153 = vmatpush1.bf16.xpose.msra.mxu0 0
        %1154 = vmatprep.subr.bf16.mxu0 0
        %1155 = vmatpush1.bf16.xpose.msra.mxu0 0
        %1156 = vmatprep.subr.bf16.mxu0 0
        %1157 = vmatpush1.bf16.xpose.msra.mxu0 0
        %1158 = vmatprep.subr.bf16.mxu0 0
        %1159 = vmatpush1.bf16.xpose.msra.mxu0 0
        %1160 = vmatprep.subr.bf16.mxu0 0
        %1161 = vmatpush1.bf16.xpose.msra.mxu0 0
        %1162 = vmatprep.mubr.bf16.mxu0 0
        %1163 = vmatmul.mubr.bf16.gmra.mrb[0].mxu0 %v1125
        %v1164 = vpop.f32.mrb[0].mxu0
        %v1165 = vadd.f32 0.0, %v1164
        %v1166 = vpop.f32.mrb[0].mxu0
        %v1167 = vpop.f32.mrb[0].mxu0
        %v1168 = vpop.f32.mrb[0].mxu0
        %1169 = vdwg.mxu0
        %v1170 = vsel %vm976, %v1018, -inf
        %1171 = vmax.xlane.f32.xlu0 %v1170
        %v1172 = vpop.xlane.xlu0 %1171
        %v1173 = vsel %vm976, %v1067, -inf
        %1174 = vmax.xlane.f32.xlu0 %v1173
        %v1175 = vpop.xlane.xlu0 %1174
        %v1176 = vsel %vm976, %v1116, -inf
        %1177 = vmax.xlane.f32.xlu0 %v1176
        %v1178 = vpop.xlane.xlu0 %1177
        %v1179 = vsel %vm976, %v1165, -inf
        %1180 = vmax.xlane.f32.xlu0 %v1179
        %v1181 = vpop.xlane.xlu0 %1180
        %v1182 = vsub.f32 %v1018, %v1172
        %v1183 = vsub.f32 %v1067, %v1175
        %v1184 = vsub.f32 %v1116, %v1178
        %v1185 = vsub.f32 %v1165, %v1181
        %v1186 = vmul.f32 %v1182, 1.442695
        %v1187 = vpow.pop %v1186
        %v1188 = vmul.f32 %v1183, 1.442695
        %v1189 = vpow.pop %v1188
        %v1190 = vmul.f32 %v1184, 1.442695
        %v1191 = vpow.pop %v1190
        %v1192 = vmul.f32 %v1185, 1.442695
        %v1193 = vpow.pop %v1192
        %v1194 = vsel %vm976, %v1187, 0.0
        %1195 = vadd.xlane.f32.xlu0 %v1194
        %v1196 = vpop.xlane.xlu0 %1195
        %v1197 = vsel %vm976, %v1189, 0.0
        %1198 = vadd.xlane.f32.xlu0 %v1197
        %v1199 = vpop.xlane.xlu0 %1198
        %v1200 = vsel %vm976, %v1191, 0.0
        %1201 = vadd.xlane.f32.xlu0 %v1200
        %v1202 = vpop.xlane.xlu0 %1201
        %v1203 = vsel %vm976, %v1193, 0.0
        %1204 = vadd.xlane.f32.xlu0 %v1203
        %v1205 = vpop.xlane.xlu0 %1204
        %v1206 = vrcp.pop %v1196
        %v1207 = vrcp.pop %v1199
        %v1208 = vrcp.pop %v1202
        %v1209 = vrcp.pop %v1205
        %v1210 = vmul.f32 %v1187, %v1206
        %v1211 = vmul.f32 %v1189, %v1207
        %v1212 = vmul.f32 %v1191, %v1208
        %v1213 = vmul.f32 %v1193, %v1209
        %v1214 = vpack.c.bf16 %v1210, %v1210
        %v1215 = vpack.c.bf16 %v1211, %v1211
        %v1216 = vpack.c.bf16 %v1212, %v1212
        %v1217 = vpack.c.bf16 %v1213, %v1213
        %1218 = vrot.lane.b32.xlu0 %v969, 64
        %v1219 = vpop.permute.xlu0 %1218
        %v1221 = vsel %vm976, %v1214, 0
        %vm1223 = vcmask 1043456
        %v1225 = vsel %vm1223, %v1219, 0
        %1227 = vmatprep.subr.bf16.mxu0 0
        %1228 = vmatpush1.bf16.msra.mxu0 %v1225
        %1229 = vmatprep.subr.bf16.mxu0 0
        %1230 = vmatpush1.bf16.msra.mxu0 0
        %1231 = vmatprep.subr.bf16.mxu0 0
        %1232 = vmatpush1.bf16.msra.mxu0 0
        %1233 = vmatprep.subr.bf16.mxu0 0
        %1234 = vmatpush1.bf16.msra.mxu0 0
        %1235 = vmatprep.subr.bf16.mxu0 0
        %1236 = vmatpush1.bf16.msra.mxu0 0
        %1237 = vmatprep.subr.bf16.mxu0 0
        %1238 = vmatpush1.bf16.msra.mxu0 0
        %1239 = vmatprep.subr.bf16.mxu0 0
        %1240 = vmatpush1.bf16.msra.mxu0 0
        %1241 = vmatprep.subr.bf16.mxu0 0
        %1242 = vmatpush1.bf16.msra.mxu0 0
        %1243 = vmatprep.subr.bf16.mxu0 0
        %1244 = vmatpush1.bf16.msra.mxu0 0
        %1245 = vmatprep.subr.bf16.mxu0 0
        %1246 = vmatpush1.bf16.msra.mxu0 0
        %1247 = vmatprep.subr.bf16.mxu0 0
        %1248 = vmatpush1.bf16.msra.mxu0 0
        %1249 = vmatprep.subr.bf16.mxu0 0
        %1250 = vmatpush1.bf16.msra.mxu0 0
        %1251 = vmatprep.subr.bf16.mxu0 0
        %1252 = vmatpush1.bf16.msra.mxu0 0
        %1253 = vmatprep.subr.bf16.mxu0 0
        %1254 = vmatpush1.bf16.msra.mxu0 0
        %1255 = vmatprep.subr.bf16.mxu0 0
        %1256 = vmatpush1.bf16.msra.mxu0 0
        %1257 = vmatprep.subr.bf16.mxu0 0
        %1258 = vmatpush1.bf16.msra.mxu0 0
        %1259 = vmatprep.mubr.bf16.mxu0 0
        %1260 = vmatmul.mubr.bf16.gmra.mrb[0].mxu0 %v1221
        %v1261 = vpop.f32.mrb[0].mxu0
        %v1262 = vadd.f32 0.0, %v1261
        %v1263 = vpop.f32.mrb[0].mxu0
        %v1264 = vpop.f32.mrb[0].mxu0
        %v1265 = vpop.f32.mrb[0].mxu0
        %1266 = vdwg.mxu0
        %1267 = vrot.lane.b32.xlu0 %v970, 64
        %v1268 = vpop.permute.xlu0 %1267
        %v1270 = vsel %vm976, %v1215, 0
        %v1273 = vsel %vm1223, %v1268, 0
        %1275 = vmatprep.subr.bf16.mxu0 0
        %1276 = vmatpush1.bf16.msra.mxu0 %v1273
        %1277 = vmatprep.subr.bf16.mxu0 0
        %1278 = vmatpush1.bf16.msra.mxu0 0
        %1279 = vmatprep.subr.bf16.mxu0 0
        %1280 = vmatpush1.bf16.msra.mxu0 0
        %1281 = vmatprep.subr.bf16.mxu0 0
        %1282 = vmatpush1.bf16.msra.mxu0 0
        %1283 = vmatprep.subr.bf16.mxu0 0
        %1284 = vmatpush1.bf16.msra.mxu0 0
        %1285 = vmatprep.subr.bf16.mxu0 0
        %1286 = vmatpush1.bf16.msra.mxu0 0
        %1287 = vmatprep.subr.bf16.mxu0 0
        %1288 = vmatpush1.bf16.msra.mxu0 0
        %1289 = vmatprep.subr.bf16.mxu0 0
        %1290 = vmatpush1.bf16.msra.mxu0 0
        %1291 = vmatprep.subr.bf16.mxu0 0
        %1292 = vmatpush1.bf16.msra.mxu0 0
        %1293 = vmatprep.subr.bf16.mxu0 0
        %1294 = vmatpush1.bf16.msra.mxu0 0
        %1295 = vmatprep.subr.bf16.mxu0 0
        %1296 = vmatpush1.bf16.msra.mxu0 0
        %1297 = vmatprep.subr.bf16.mxu0 0
        %1298 = vmatpush1.bf16.msra.mxu0 0
        %1299 = vmatprep.subr.bf16.mxu0 0
        %1300 = vmatpush1.bf16.msra.mxu0 0
        %1301 = vmatprep.subr.bf16.mxu0 0
        %1302 = vmatpush1.bf16.msra.mxu0 0
        %1303 = vmatprep.subr.bf16.mxu0 0
        %1304 = vmatpush1.bf16.msra.mxu0 0
        %1305 = vmatprep.subr.bf16.mxu0 0
        %1306 = vmatpush1.bf16.msra.mxu0 0
        %1307 = vmatprep.mubr.bf16.mxu0 0
        %1308 = vmatmul.mubr.bf16.gmra.mrb[0].mxu0 %v1270
        %v1309 = vpop.f32.mrb[0].mxu0
        %v1310 = vadd.f32 0.0, %v1309
        %v1311 = vpop.f32.mrb[0].mxu0
        %v1312 = vpop.f32.mrb[0].mxu0
        %v1313 = vpop.f32.mrb[0].mxu0
        %1314 = vdwg.mxu0
        %1315 = vrot.lane.b32.xlu0 %v971, 64
        %v1316 = vpop.permute.xlu0 %1315
        %v1318 = vsel %vm976, %v1216, 0
        %v1321 = vsel %vm1223, %v1316, 0
        %1323 = vmatprep.subr.bf16.mxu0 0
        %1324 = vmatpush1.bf16.msra.mxu0 %v1321
        %1325 = vmatprep.subr.bf16.mxu0 0
        %1326 = vmatpush1.bf16.msra.mxu0 0
        %1327 = vmatprep.subr.bf16.mxu0 0
        %1328 = vmatpush1.bf16.msra.mxu0 0
        %1329 = vmatprep.subr.bf16.mxu0 0
        %1330 = vmatpush1.bf16.msra.mxu0 0
        %1331 = vmatprep.subr.bf16.mxu0 0
        %1332 = vmatpush1.bf16.msra.mxu0 0
        %1333 = vmatprep.subr.bf16.mxu0 0
        %1334 = vmatpush1.bf16.msra.mxu0 0
        %1335 = vmatprep.subr.bf16.mxu0 0
        %1336 = vmatpush1.bf16.msra.mxu0 0
        %1337 = vmatprep.subr.bf16.mxu0 0
        %1338 = vmatpush1.bf16.msra.mxu0 0
        %1339 = vmatprep.subr.bf16.mxu0 0
        %1340 = vmatpush1.bf16.msra.mxu0 0
        %1341 = vmatprep.subr.bf16.mxu0 0
        %1342 = vmatpush1.bf16.msra.mxu0 0
        %1343 = vmatprep.subr.bf16.mxu0 0
        %1344 = vmatpush1.bf16.msra.mxu0 0
        %1345 = vmatprep.subr.bf16.mxu0 0
        %1346 = vmatpush1.bf16.msra.mxu0 0
        %1347 = vmatprep.subr.bf16.mxu0 0
        %1348 = vmatpush1.bf16.msra.mxu0 0
        %1349 = vmatprep.subr.bf16.mxu0 0
        %1350 = vmatpush1.bf16.msra.mxu0 0
        %1351 = vmatprep.subr.bf16.mxu0 0
        %1352 = vmatpush1.bf16.msra.mxu0 0
        %1353 = vmatprep.subr.bf16.mxu0 0
        %1354 = vmatpush1.bf16.msra.mxu0 0
        %1355 = vmatprep.mubr.bf16.mxu0 0
        %1356 = vmatmul.mubr.bf16.gmra.mrb[0].mxu0 %v1318
        %v1357 = vpop.f32.mrb[0].mxu0
        %v1358 = vadd.f32 0.0, %v1357
        %v1359 = vpop.f32.mrb[0].mxu0
        %v1360 = vpop.f32.mrb[0].mxu0
        %v1361 = vpop.f32.mrb[0].mxu0
        %1362 = vdwg.mxu0
        %1363 = vrot.lane.b32.xlu0 %v972, 64
        %v1364 = vpop.permute.xlu0 %1363
        %v1366 = vsel %vm976, %v1217, 0
        %v1369 = vsel %vm1223, %v1364, 0
        %1371 = vmatprep.subr.bf16.mxu0 0
        %1372 = vmatpush1.bf16.msra.mxu0 %v1369
        %1373 = vmatprep.subr.bf16.mxu0 0
        %1374 = vmatpush1.bf16.msra.mxu0 0
        %1375 = vmatprep.subr.bf16.mxu0 0
        %1376 = vmatpush1.bf16.msra.mxu0 0
        %1377 = vmatprep.subr.bf16.mxu0 0
        %1378 = vmatpush1.bf16.msra.mxu0 0
        %1379 = vmatprep.subr.bf16.mxu0 0
        %1380 = vmatpush1.bf16.msra.mxu0 0
        %1381 = vmatprep.subr.bf16.mxu0 0
        %1382 = vmatpush1.bf16.msra.mxu0 0
        %1383 = vmatprep.subr.bf16.mxu0 0
        %1384 = vmatpush1.bf16.msra.mxu0 0
        %1385 = vmatprep.subr.bf16.mxu0 0
        %1386 = vmatpush1.bf16.msra.mxu0 0
        %1387 = vmatprep.subr.bf16.mxu0 0
        %1388 = vmatpush1.bf16.msra.mxu0 0
        %1389 = vmatprep.subr.bf16.mxu0 0
        %1390 = vmatpush1.bf16.msra.mxu0 0
        %1391 = vmatprep.subr.bf16.mxu0 0
        %1392 = vmatpush1.bf16.msra.mxu0 0
        %1393 = vmatprep.subr.bf16.mxu0 0
        %1394 = vmatpush1.bf16.msra.mxu0 0
        %1395 = vmatprep.subr.bf16.mxu0 0
        %1396 = vmatpush1.bf16.msra.mxu0 0
        %1397 = vmatprep.subr.bf16.mxu0 0
        %1398 = vmatpush1.bf16.msra.mxu0 0
        %1399 = vmatprep.subr.bf16.mxu0 0
        %1400 = vmatpush1.bf16.msra.mxu0 0
        %1401 = vmatprep.subr.bf16.mxu0 0
        %1402 = vmatpush1.bf16.msra.mxu0 0
        %1403 = vmatprep.mubr.bf16.mxu0 0
        %1404 = vmatmul.mubr.bf16.gmra.mrb[0].mxu0 %v1366
        %v1405 = vpop.f32.mrb[0].mxu0
        %v1406 = vadd.f32 0.0, %v1405
        %v1407 = vpop.f32.mrb[0].mxu0
        %v1408 = vpop.f32.mrb[0].mxu0
        %v1409 = vpop.f32.mrb[0].mxu0
        %1410 = vdwg.mxu0
        %1412 = vrot.lane.b32.xlu0 %v1310, 8
        %v1413 = vpop.permute.xlu0 %1412
        %1416 = vrot.lane.b32.xlu0 %v1358, 16
        %v1417 = vpop.permute.xlu0 %1416
        %1420 = vrot.lane.b32.xlu0 %v1406, 24
        %v1421 = vpop.permute.xlu0 %1420
        %v1423 = vsel %vm976, %v1262, %v1413
        %vm1424 = vcmask 130048
        %v1425 = vsel %vm1424, %v1423, %v1417
        %vm1426 = vcmask 195584
        %v1427 = vsel %vm1426, %v1425, %v1421
        %v1428 = vpack.c.bf16 %v1427, %v1427
        %v1429 = vld [vmem:[%s713] sm:$0xf]
        %v1430 = vld [vmem:[%s713 + $0x4] sm:$0xf]
        %v1431 = vld [vmem:[%s713 + $0x8] sm:$0xf]
        %v1432 = vld [vmem:[%s713 + $0xc] sm:$0xf]
        %v1433 = vld [vmem:[%s721] sm:$0x1]
        %v1435 = vlaneseq
        %v1436 = vshrl.u32 %v1435, 7
        %v1437 = vsub.s32 0, %v1436
        %v1438 = vrot.slane %v1433, %v1437
        %v1444 = vunpack.c.l.b16 %v1429
        %v1445 = vunpack.c.l.b16 %v1430
        %v1446 = vunpack.c.l.b16 %v1431
        %v1447 = vunpack.c.l.b16 %v1432
        %v1448 = vpack.c.b16 %v1445, %v1444
        %v1449 = vpack.c.b16 %v1447, %v1446
        %v1453 = vsel %vm915, %v1428, 0
        %1455 = vmatprep.subr.bf16.mxu0 0
        %1456 = vmatpush1.bf16.msra.mxu0 %v1448
        %1457 = vmatprep.subr.bf16.mxu0 0
        %1458 = vmatpush1.bf16.msra.mxu0 %v1449
        %1459 = vmatprep.subr.bf16.mxu0 0
        %1460 = vmatpush1.bf16.msra.mxu0 0
        %1461 = vmatprep.subr.bf16.mxu0 0
        %1462 = vmatpush1.bf16.msra.mxu0 0
        %1463 = vmatprep.subr.bf16.mxu0 0
        %1464 = vmatpush1.bf16.msra.mxu0 0
        %1465 = vmatprep.subr.bf16.mxu0 0
        %1466 = vmatpush1.bf16.msra.mxu0 0
        %1467 = vmatprep.subr.bf16.mxu0 0
        %1468 = vmatpush1.bf16.msra.mxu0 0
        %1469 = vmatprep.subr.bf16.mxu0 0
        %1470 = vmatpush1.bf16.msra.mxu0 0
        %1471 = vmatprep.subr.bf16.mxu0 0
        %1472 = vmatpush1.bf16.msra.mxu0 0
        %1473 = vmatprep.subr.bf16.mxu0 0
        %1474 = vmatpush1.bf16.msra.mxu0 0
        %1475 = vmatprep.subr.bf16.mxu0 0
        %1476 = vmatpush1.bf16.msra.mxu0 0
        %1477 = vmatprep.subr.bf16.mxu0 0
        %1478 = vmatpush1.bf16.msra.mxu0 0
        %1479 = vmatprep.subr.bf16.mxu0 0
        %1480 = vmatpush1.bf16.msra.mxu0 0
        %1481 = vmatprep.subr.bf16.mxu0 0
        %1482 = vmatpush1.bf16.msra.mxu0 0
        %1483 = vmatprep.subr.bf16.mxu0 0
        %1484 = vmatpush1.bf16.msra.mxu0 0
        %1485 = vmatprep.subr.bf16.mxu0 0
        %1486 = vmatpush1.bf16.msra.mxu0 0
        %1487 = vmatprep.mubr.bf16.mxu0 0
        %1488 = vmatmul.mubr.bf16.gmra.mrb[0].mxu0 %v1453
        %v1489 = vpop.f32.mrb[0].mxu0
        %v1490 = vadd.f32 %v1438, %v1489
        %v1491 = vpop.f32.mrb[0].mxu0
        %v1492 = vpop.f32.mrb[0].mxu0
        %v1493 = vpop.f32.mrb[0].mxu0
        %1494 = vdwg.mxu0
        %v1495 = vadd.f32 %v890, %v1490
        %v1496 = vld [vmem:[%s763] sm:$0x1]
        %v1497 = vld [vmem:[%s771] sm:$0x1]
        %v1498 = vsel %vm915, %v1495, 0.0
        %1499 = vadd.xlane.f32.xlu0 %v1498
        %v1500 = vpop.xlane.xlu0 %1499
        %v1501 = vrcp.pop 32.0
        %v1502 = vmul.f32 %v1500, %v1501
        %v1503 = vsub.f32 %v1495, %v1502
        %v1504 = vmul.f32 %v1503, %v1503
        %v1505 = vsel %vm915, %v1504, 0.0
        %1506 = vadd.xlane.f32.xlu0 %v1505
        %v1507 = vpop.xlane.xlu0 %1506
        %v1508 = vmul.f32 %v1507, %v1501
        %v1509 = vadd.f32 %v1508, 1e-05
        %v1510 = vrsqrt.pop %v1509
        %v1511 = vmul.f32 %v1503, %v1510
        %v1513 = vlaneseq
        %v1514 = vshrl.u32 %v1513, 7
        %v1515 = vsub.s32 0, %v1514
        %v1516 = vrot.slane %v1496, %v1515
        %v1518 = vmul.f32 %v1511, %v1516
        %v1520 = vlaneseq
        %v1521 = vshrl.u32 %v1520, 7
        %v1522 = vsub.s32 0, %v1521
        %v1523 = vrot.slane %v1497, %v1522
        %v1525 = vadd.f32 %v1518, %v1523
        %v1526 = vpack.c.bf16 %v1525, %v1525
        %v1527 = vld [vmem:[%s730] sm:$0xf]
        %v1528 = vld [vmem:[%s730 + $0x4] sm:$0xf]
        %v1529 = vld [vmem:[%s730 + $0x8] sm:$0xf]
        %v1530 = vld [vmem:[%s730 + $0xc] sm:$0xf]
        %v1531 = vld [vmem:[%s738] sm:$0x1]
        %v1533 = vlaneseq
        %v1534 = vshrl.u32 %v1533, 7
        %v1535 = vsub.s32 0, %v1534
        %v1536 = vrot.slane %v1531, %v1535
        %v1542 = vunpack.c.l.b16 %v1527
        %v1543 = vunpack.c.l.b16 %v1528
        %v1544 = vunpack.c.l.b16 %v1529
        %v1545 = vunpack.c.l.b16 %v1530
        %v1546 = vpack.c.b16 %v1543, %v1542
        %v1547 = vpack.c.b16 %v1545, %v1544
        %v1551 = vsel %vm915, %v1526, 0
        %1553 = vmatprep.subr.bf16.mxu0 0
        %1554 = vmatpush1.bf16.msra.mxu0 %v1546
        %1555 = vmatprep.subr.bf16.mxu0 0
        %1556 = vmatpush1.bf16.msra.mxu0 %v1547
        %1557 = vmatprep.subr.bf16.mxu0 0
        %1558 = vmatpush1.bf16.msra.mxu0 0
        %1559 = vmatprep.subr.bf16.mxu0 0
        %1560 = vmatpush1.bf16.msra.mxu0 0
        %1561 = vmatprep.subr.bf16.mxu0 0
        %1562 = vmatpush1.bf16.msra.mxu0 0
        %1563 = vmatprep.subr.bf16.mxu0 0
        %1564 = vmatpush1.bf16.msra.mxu0 0
        %1565 = vmatprep.subr.bf16.mxu0 0
        %1566 = vmatpush1.bf16.msra.mxu0 0
        %1567 = vmatprep.subr.bf16.mxu0 0
        %1568 = vmatpush1.bf16.msra.mxu0 0
        %1569 = vmatprep.subr.bf16.mxu0 0
        %1570 = vmatpush1.bf16.msra.mxu0 0
        %1571 = vmatprep.subr.bf16.mxu0 0
        %1572 = vmatpush1.bf16.msra.mxu0 0
        %1573 = vmatprep.subr.bf16.mxu0 0
        %1574 = vmatpush1.bf16.msra.mxu0 0
        %1575 = vmatprep.subr.bf16.mxu0 0
        %1576 = vmatpush1.bf16.msra.mxu0 0
        %1577 = vmatprep.subr.bf16.mxu0 0
        %1578 = vmatpush1.bf16.msra.mxu0 0
        %1579 = vmatprep.subr.bf16.mxu0 0
        %1580 = vmatpush1.bf16.msra.mxu0 0
        %1581 = vmatprep.subr.bf16.mxu0 0
        %1582 = vmatpush1.bf16.msra.mxu0 0
        %1583 = vmatprep.subr.bf16.mxu0 0
        %1584 = vmatpush1.bf16.msra.mxu0 0
        %1585 = vmatprep.mubr.bf16.mxu0 0
        %1586 = vmatmul.mubr.bf16.gmra.mrb[0].mxu0 %v1551
        %v1587 = vpop.f32.mrb[0].mxu0
        %v1588 = vadd.f32 %v1536, %v1587
        %v1589 = vpop.f32.mrb[0].mxu0
        %v1590 = vpop.f32.mrb[0].mxu0
        %v1591 = vpop.f32.mrb[0].mxu0
        %1592 = vdwg.mxu0
        %v1593 = vmax.f32 %v1588, 0.0
        %v1594 = vpack.c.bf16 %v1593, %v1593
        %v1595 = vld [vmem:[%s747] sm:$0xf]
        %v1596 = vld [vmem:[%s747 + $0x4] sm:$0xf]
        %v1597 = vld [vmem:[%s747 + $0x8] sm:$0xf]
        %v1598 = vld [vmem:[%s747 + $0xc] sm:$0xf]
        %v1599 = vld [vmem:[%s747 + $0x10] sm:$0xf]
        %v1600 = vld [vmem:[%s747 + $0x14] sm:$0xf]
        %v1601 = vld [vmem:[%s747 + $0x18] sm:$0xf]
        %v1602 = vld [vmem:[%s747 + $0x1c] sm:$0xf]
        %v1603 = vld [vmem:[%s755] sm:$0x1]
        %v1605 = vlaneseq
        %v1606 = vshrl.u32 %v1605, 7
        %v1607 = vsub.s32 0, %v1606
        %v1608 = vrot.slane %v1603, %v1607
        %v1618 = vunpack.c.l.b16 %v1595
        %v1619 = vunpack.c.l.b16 %v1596
        %v1620 = vunpack.c.l.b16 %v1597
        %v1621 = vunpack.c.l.b16 %v1598
        %v1622 = vunpack.c.l.b16 %v1599
        %v1623 = vunpack.c.l.b16 %v1600
        %v1624 = vunpack.c.l.b16 %v1601
        %v1625 = vunpack.c.l.b16 %v1602
        %v1626 = vpack.c.b16 %v1619, %v1618
        %v1627 = vpack.c.b16 %v1621, %v1620
        %v1628 = vpack.c.b16 %v1623, %v1622
        %v1629 = vpack.c.b16 %v1625, %v1624
        %vm1634 = vcmask 523264
        %v1636 = vsel %vm1634, %v1594, 0
        %1638 = vmatprep.subr.bf16.mxu0 0
        %1639 = vmatpush1.bf16.msra.mxu0 %v1626
        %1640 = vmatprep.subr.bf16.mxu0 0
        %1641 = vmatpush1.bf16.msra.mxu0 %v1627
        %1642 = vmatprep.subr.bf16.mxu0 0
        %1643 = vmatpush1.bf16.msra.mxu0 %v1628
        %1644 = vmatprep.subr.bf16.mxu0 0
        %1645 = vmatpush1.bf16.msra.mxu0 %v1629
        %1646 = vmatprep.subr.bf16.mxu0 0
        %1647 = vmatpush1.bf16.msra.mxu0 0
        %1648 = vmatprep.subr.bf16.mxu0 0
        %1649 = vmatpush1.bf16.msra.mxu0 0
        %1650 = vmatprep.subr.bf16.mxu0 0
        %1651 = vmatpush1.bf16.msra.mxu0 0
        %1652 = vmatprep.subr.bf16.mxu0 0
        %1653 = vmatpush1.bf16.msra.mxu0 0
        %1654 = vmatprep.subr.bf16.mxu0 0
        %1655 = vmatpush1.bf16.msra.mxu0 0
        %1656 = vmatprep.subr.bf16.mxu0 0
        %1657 = vmatpush1.bf16.msra.mxu0 0
        %1658 = vmatprep.subr.bf16.mxu0 0
        %1659 = vmatpush1.bf16.msra.mxu0 0
        %1660 = vmatprep.subr.bf16.mxu0 0
        %1661 = vmatpush1.bf16.msra.mxu0 0
        %1662 = vmatprep.subr.bf16.mxu0 0
        %1663 = vmatpush1.bf16.msra.mxu0 0
        %1664 = vmatprep.subr.bf16.mxu0 0
        %1665 = vmatpush1.bf16.msra.mxu0 0
        %1666 = vmatprep.subr.bf16.mxu0 0
        %1667 = vmatpush1.bf16.msra.mxu0 0
        %1668 = vmatprep.subr.bf16.mxu0 0
        %1669 = vmatpush1.bf16.msra.mxu0 0
        %1670 = vmatprep.mubr.bf16.mxu0 0
        %1671 = vmatmul.mubr.bf16.gmra.mrb[0].mxu0 %v1636
        %v1672 = vpop.f32.mrb[0].mxu0
        %v1673 = vadd.f32 %v1608, %v1672
        %v1674 = vpop.f32.mrb[0].mxu0
        %v1675 = vpop.f32.mrb[0].mxu0
        %v1676 = vpop.f32.mrb[0].mxu0
        %1677 = vdwg.mxu0
        %v1678 = vadd.f32 %v1525, %v1673
        %v1679 = vld [vmem:[%s779] sm:$0x1]
        %v1680 = vld [vmem:[%s787] sm:$0x1]
        %v1681 = vsel %vm915, %v1678, 0.0
        %1682 = vadd.xlane.f32.xlu0 %v1681
        %v1683 = vpop.xlane.xlu0 %1682
        %v1684 = vmul.f32 %v1683, %v1501
        %v1685 = vsub.f32 %v1678, %v1684
        %v1686 = vmul.f32 %v1685, %v1685
        %v1687 = vsel %vm915, %v1686, 0.0
        %1688 = vadd.xlane.f32.xlu0 %v1687
        %v1689 = vpop.xlane.xlu0 %1688
        %v1690 = vmul.f32 %v1689, %v1501
        %v1691 = vadd.f32 %v1690, 1e-05
        %v1692 = vrsqrt.pop %v1691
        %v1693 = vmul.f32 %v1685, %v1692
        %v1695 = vlaneseq
        %v1696 = vshrl.u32 %v1695, 7
        %v1697 = vsub.s32 0, %v1696
        %v1698 = vrot.slane %v1679, %v1697
        %v1700 = vmul.f32 %v1693, %v1698
        %v1702 = vlaneseq
        %v1703 = vshrl.u32 %v1702, 7
        %v1704 = vsub.s32 0, %v1703
        %v1705 = vrot.slane %v1680, %v1704
        %v1707 = vadd.f32 %v1700, %v1705
        %1708 = vst.msk [vmem:[%s881] sm:$0xff] %vm915, %v1707
        %s1709 = sand.u32 %s406, 1
        %s1710 = scalar_lea.sflag [#allocation4], %s1709
        %s1711 = sand.u32 %s406, 1
        %s1712 = smul.addr %s1711, 8
        %s1713 = scalar_lea.vmem [#allocation23], %s1712
        // Predicated region
        $region129: #{encoder_forward.1} parent=71 // pred_check
          %p1714 = pneg %p416
        $region130: #{encoder_forward.1} parent=71 // pred_check_branch
          %1716 = sbr.rel (%p1714) target = $region132
        $region131: #{encoder_forward.1} parent=71 // pred_region
          %s1718 = ssub.s32 128, 128
          %1719 = vsyncadd %s1710, %s1718
          %s1720 = smul.addr %s52, 128
          %s1721 = scalar_lea.hbm %s13, %s1720
          %s1723 = sshll.u32 %s1713, 4
          %s1724 = int_to_ptr.vmem [resolvable:$true] %s1723
          %1726 = dma.vmem_to_hbm [thread:$0]  %s1724, 128, %s1721, %s1710
        $region132: #{encoder_forward.1} parent=71 // pred_fallthru
          _
      $region72: #{encoder_forward.1} parent=5 // pred_fallthru
        _
      %p1727 = scmp.le.s32.totalorder 2, %s43
      // Predicated region
      $region133: #{encoder_forward.1} parent=5 // pred_check
        %p1728 = pneg %p1727
      $region134: #{encoder_forward.1} parent=5 // pred_check_branch
        %1730 = sbr.rel (%p1728) target = $region136
      $region135: #{encoder_forward.1} parent=5 // pred_region
        %s1731 = ssub.s32 %s43, 2
        // Predicated region
        $region137: #{encoder_forward.1} parent=135 // pred_check
          %p1732 = pneg %p422
        $region138: #{encoder_forward.1} parent=135 // pred_check_branch
          %1734 = sbr.rel (%p1732) target = $region140
        $region139: #{encoder_forward.1} parent=135 // pred_region
          %s1735 = sand.u32 %s407, 1
          %s1736 = scalar_lea.sflag [#allocation4], %s1735
          %s1737 = sand.u32 %s407, 1
          %s1738 = smul.addr %s1737, 8
          %s1739 = scalar_lea.vmem [#allocation23], %s1738
          %1740 = dma.done %s1736, 128
        $region140: #{encoder_forward.1} parent=135 // pred_fallthru
          _
      $region136: #{encoder_forward.1} parent=5 // pred_fallthru
        _
    $region6: #{encoder_forward.1} parent=1 // loop_footer
      %s47 = sadd.s32 1, %s43
    $region7: #{encoder_forward.1} parent=1 // loop_footer_branch
      %42 = sbr.rel target = $region3
    $region8: #{encoder_forward.1} parent=1 // loop_exit
      _
    %1741 = vsyncpa [#allocation3], 1
    %s1742 = scalar_lea.sflag [#allocation3], 1
    %1743 = vsyncpa %s1742, 1
    %1744 = vsyncpa [#allocation6], 1
    %s1745 = scalar_lea.sflag [#allocation6], 1
    %1746 = vsyncpa %s1745, 1
    %1747 = vsyncpa [#allocation9], 1
    %s1748 = scalar_lea.sflag [#allocation9], 1
    %1749 = vsyncpa %s1748, 1
    %1750 = vsyncpa [#allocation12], 1
    %s1751 = scalar_lea.sflag [#allocation12], 1
    %1752 = vsyncpa %s1751, 1
    %1753 = vsyncpa [#allocation15], 1
    %s1754 = scalar_lea.sflag [#allocation15], 1
    %1755 = vsyncpa %s1754, 1
    %1756 = vsyncpa [#allocation18], 1
    %s1757 = scalar_lea.sflag [#allocation18], 1
    %1758 = vsyncpa %s1757, 1
    %1759 = vsyncpa [#allocation21], 1
    %s1760 = scalar_lea.sflag [#allocation21], 1
    %1761 = vsyncpa %s1760, 1
    %1762 = vsyncpa [#allocation4], 1
    %s1763 = scalar_lea.sflag [#allocation4], 1
    %1764 = vsyncpa %s1763, 1

</llo_original>
